<compile_context>
chip_gen: v6e
topology: v6e:2x2x1
jax: 0.10.0
libtpu: 0.0.40
codegen_flags: <defaults>
</compile_context>

<pallas_src>
import functools
import numpy as np
import jax
import jax.numpy as jnp
from jax import lax
from jax.experimental import pallas as pl
from jax.experimental.pallas import tpu as pltpu


def _block_kernel(learnable_res, W, *refs):
    """One grid step = NB images.

    refs (learnable_res=False):
        x_ref  : (NB, C, H*W) f32   input images (channels on sublanes)
        w1_ref : (C, 9*C)     cdt   conv1 weight with BN1 scale folded in
        b1_ref : (C, 1)       f32   folded BN1 shift
        w2_ref : (C, 9*C)     cdt
        b2_ref : (C, 1)       f32
        out_ref: (NB, C, H*W) f32
    learnable_res=True additionally has wr_ref/br_ref before out_ref.
    """
    if learnable_res:
        (x_ref, w1_ref, b1_ref, w2_ref, b2_ref,
         wr_ref, br_ref, out_ref) = refs
    else:
        (x_ref, w1_ref, b1_ref, w2_ref, b2_ref, out_ref) = refs

    NB, C, HW = x_ref.shape
    H = HW // W
    L = NB * HW
    cdt = w1_ref.dtype                       # matmul compute dtype (bf16 or f32)

    # Lay the NB images side by side along lanes: (C, NB*HW).  Kept f32 for the
    # (non-learnable) residual add; taps are cast to the compute dtype inside
    # im2col.  Concatenation boundaries are multiples of HW (lane-aligned for
    # HW % 128 == 0).
    if NB > 1:
        x = jnp.concatenate([x_ref[n] for n in range(NB)], axis=1)
    else:
        x = x_ref[0]

    # ---- boundary masks, generated in-kernel (no mask input stream) --------
    pos = lax.broadcasted_iota(jnp.int32, (1, L), 1)
    if (W & (W - 1)) == 0 and (HW & (HW - 1)) == 0:
        # powers of two (common CNN case / this test): pure bit ops on the VPU
        col = pos & (W - 1)
        row = (pos & (HW - 1)) >> (W.bit_length() - 1)
    else:
        # general case: relies on vector s32 div/mod lowering
        q = pos % HW
        col = q % W
        row = q // W
    edge = {(-1, 0): row >= 1, (1, 0): row <= H - 2,
            (0, -1): col >= 1, (0, 1): col <= W - 2}

    tap_mask = {}
    for dh in (-1, 0, 1):
        for dw in (-1, 0, 1):
            m = None
            if dh != 0:
                m = edge[(dh, 0)]
            if dw != 0:
                m = edge[(0, dw)] if m is None else jnp.logical_and(m, edge[(0, dw)])
            # 0/1 mask in the compute dtype (tiny (1, L) row, built once)
            tap_mask[(dh, dw)] = (None if m is None
                                  else jnp.where(m, 1.0, 0.0).astype(cdt))

    def im2col(v):
        """v: (C, L) f32 -> patches (9*C, L) in the compute dtype.

        Each tap is an XLU lane roll of the whole NB-image slab; boundary
        rows/columns (including inter-image wrap-around from the roll) are
        zeroed by the 0/1 masks.  Rows are tap-major / channel-minor, matching
        the folded-weight column order.
        """
        vc = v.astype(cdt)                   # build the slab directly in bf16
        taps = []
        for dh in (-1, 0, 1):
            for dw in (-1, 0, 1):
                off = dh * W + dw
                t = vc if off == 0 else pltpu.roll(vc, (-off) % L, axis=1)
                m = tap_mask[(dh, dw)]
                if m is not None:
                    t = t * m
                taps.append(t)
        return jnp.concatenate(taps, axis=0)  # (9*C, L)

    # conv1 (+ folded BN1) + ReLU — single K=9C matmul on the MXU
    p1 = im2col(x)
    h = jnp.dot(w1_ref[...], p1, preferred_element_type=jnp.float32)
    h = jnp.maximum(h + b1_ref[...], 0.0)                 # (C, L) f32

    # conv2 (+ folded BN2)
    p2 = im2col(h)
    y = jnp.dot(w2_ref[...], p2, preferred_element_type=jnp.float32)
    y = y + b2_ref[...]

    # residual branch (learnable conv reuses the conv1 im2col patches)
    if learnable_res:
        r = jnp.dot(wr_ref[...], p1, preferred_element_type=jnp.float32)
        r = r + br_ref[...]
    else:
        r = x

    out = jnp.maximum(y + r, 0.0)
    # per-image lane-dense stores (HW a multiple of 128 keeps them unmasked)
    for n in range(NB):
        out_ref[n] = out[:, n * HW:(n + 1) * HW]


def _fold_bn_into_conv(w, b, gamma, beta, mean, var, eps=1e-5):
    """Fold eval-mode BatchNorm into the preceding conv.

    w: (Cout, Cin, 3, 3) torch layout.  Returns
      wmat : (Cout, 9*Cin) f32, rows pre-scaled by gamma/sqrt(var+eps)
      shift: (Cout, 1)     f32, = (bias - mean)*scale + beta
    Column order of wmat is (kh, kw, cin) flattened -> matches the
    tap-major/channel-minor patch rows produced by the kernel's im2col.
    """
    cout = w.shape[0]
    scale = gamma / jnp.sqrt(var + eps)
    wmat = jnp.transpose(w, (0, 2, 3, 1)).reshape(cout, -1).astype(jnp.float32)
    wmat = wmat * scale[:, None]
    shift = (b - mean) * scale + beta
    return wmat, shift.reshape(-1, 1).astype(jnp.float32)


def block_forward(x_nchw, params, learnable_res=False,
                  compute_dtype=jnp.bfloat16, images_per_step=None):
    """Forward pass of `Block` (eval-mode BN). x_nchw: (N, C, H, W) float32."""
    N, C, H, W = x_nchw.shape
    HW = H * W
    # NCHW -> (N, C, H*W): metadata-only reshape; no transpose / pad HBM pass.
    x = x_nchw.reshape(N, C, HW).astype(jnp.float32)

    # --- images per grid step (lane batching) --------------------------------
    if images_per_step is None:
        slab = 9 * C * HW * np.dtype(compute_dtype).itemsize   # patch bytes / image
        nb_cap = max(1, (4 << 20) // max(slab, 1))              # keep slab <= ~4 MiB
        NB = int(max(1, min(pl.cdiv(N, 2), nb_cap)))            # >=2 steps for v7x 2 TCs
    else:
        NB = int(max(1, min(images_per_step, N)))
    G = int(pl.cdiv(N, NB))
    n_pad = G * NB
    if n_pad != N:                                              # pad remainder step
        x = jnp.pad(x, ((0, n_pad - N), (0, 0), (0, 0)))

    w1, b1 = _fold_bn_into_conv(params["w1"], params["b1"], params["g1"],
                                params["be1"], params["m1"], params["v1"])
    w2, b2 = _fold_bn_into_conv(params["w2"], params["b2"], params["g2"],
                                params["be2"], params["m2"], params["v2"])
    args = [x, w1.astype(compute_dtype), b1, w2.astype(compute_dtype), b2]
    if learnable_res:
        wr, br = _fold_bn_into_conv(params["wr"], params["br"], params["gr"],
                                    params["ber"], params["mr"], params["vr"])
        args += [wr.astype(compute_dtype), br]

    def make_specs(single_buffer_consts):
        pm = dict(pipeline_mode=pl.Buffered(1)) if single_buffer_consts else {}
        img_spec = pl.BlockSpec((NB, C, HW), lambda g: (g, 0, 0))
        w_spec = pl.BlockSpec((C, 9 * C), lambda g: (0, 0), **pm)
        b_spec = pl.BlockSpec((C, 1), lambda g: (0, 0), **pm)
        in_specs = [img_spec, w_spec, b_spec, w_spec, b_spec]
        if learnable_res:
            in_specs += [w_spec, b_spec]
        return img_spec, in_specs

    def run(single_buffer_consts):
        img_spec, in_specs = make_specs(single_buffer_consts)
        return pl.pallas_call(
            functools.partial(_block_kernel, learnable_res, W),
            out_shape=jax.ShapeDtypeStruct((n_pad, C, HW), jnp.float32),
            grid_spec=pltpu.PrefetchScalarGridSpec(
                num_scalar_prefetch=0,
                grid=(G,),
                in_specs=in_specs,
                out_specs=img_spec,
            ),
            compiler_params=pltpu.CompilerParams(
                dimension_semantics=("parallel",)),
        )(*args)

    try:
        # single-buffer the grid-invariant weights/shifts (constant index_map)
        out = jax.block_until_ready(run(True))
    except Exception:   # fallback if this jax build rejects pipeline_mode
        out = run(False)

    if n_pad != N:
        out = out[:N]
    return out.reshape(N, C, H, W)


def _ref_forward(x, p, learnable_res=False, eps=1e-5):
    """Pure-JAX reference mirroring the PyTorch module (eval-mode BN)."""
    def conv(z, w, b):
        y = lax.conv_general_dilated(z, w, (1, 1), ((1, 1), (1, 1)),
                                     dimension_numbers=("NCHW", "OIHW", "NCHW"))
        return y + b.reshape(1, -1, 1, 1)

    def bn(z, g, be, m, v):
        return ((z - m.reshape(1, -1, 1, 1)) / jnp.sqrt(v.reshape(1, -1, 1, 1) + eps)
                * g.reshape(1, -1, 1, 1) + be.reshape(1, -1, 1, 1))

    out = bn(conv(x, p["w1"], p["b1"]), p["g1"], p["be1"], p["m1"], p["v1"])
    out = jnp.maximum(out, 0.0)
    out = bn(conv(out, p["w2"], p["b2"]), p["g2"], p["be2"], p["m2"], p["v2"])
    if learnable_res:
        out = out + bn(conv(x, p["wr"], p["br"]), p["gr"], p["ber"], p["mr"], p["vr"])
    else:
        out = out + x
    return jnp.maximum(out, 0.0)


if __name__ == "__main__":
    key = jax.random.PRNGKey(0)
    C, N, H, W = 8, 4, 16, 16            # width=8, batch=4 (2 images / grid step)

    keys = iter(jax.random.split(key, 24))

    def conv_bn(prefix):
        return {
            "w" + prefix: 0.1 * jax.random.normal(next(keys), (C, C, 3, 3), jnp.float32),
            "b" + prefix: 0.1 * jax.random.normal(next(keys), (C,), jnp.float32),
            "g" + prefix: 1.0 + 0.1 * jax.random.normal(next(keys), (C,), jnp.float32),
            "be" + prefix: 0.1 * jax.random.normal(next(keys), (C,), jnp.float32),
            "m" + prefix: 0.1 * jax.random.normal(next(keys), (C,), jnp.float32),
            "v" + prefix: 1.0 + 0.5 * jax.random.uniform(next(keys), (C,), jnp.float32),
        }

    params = {}
    params.update(conv_bn("1"))
    params.update(conv_bn("2"))
    params.update(conv_bn("r"))

    x = jax.random.normal(next(keys), (N, C, H, W), jnp.float32)

    for lr in (False, True):
        y_ref = _ref_forward(x, params, learnable_res=lr)

        # exact-semantics check: f32 matmul operands / taps, tight tolerance
        y32 = jax.block_until_ready(
            block_forward(x, params, learnable_res=lr, compute_dtype=jnp.float32))
        np.testing.assert_allclose(np.asarray(y32), np.asarray(y_ref),
                                   rtol=1e-4, atol=1e-4)

        # default fast path: bf16 patch slab / weights, f32 accumulation+epilogue
        ybf = jax.block_until_ready(block_forward(x, params, learnable_res=lr))
        np.testing.assert_allclose(np.asarray(ybf), np.asarray(y_ref),
                                   rtol=1e-1, atol=1e-1)

    # odd batch exercises the zero-padded remainder grid step (N % NB != 0)
    x3 = x[:3]
    y3 = jax.block_until_ready(block_forward(x3, params, learnable_res=False))
    np.testing.assert_allclose(np.asarray(y3),
                               np.asarray(_ref_forward(x3, params, False)),
                               rtol=1e-1, atol=1e-1)

    print("KERNEL_OK")
</pallas_src>

<mosaic_0001>
module attributes {stable_mosaic.version = 11 : i64} {
  func.func @_block_kernel(%arg0: i32, %arg1: memref<2x8x256xf32, #tpu.memory_space<vmem>>, %arg2: memref<8x72xf32, #tpu.memory_space<vmem>>, %arg3: memref<8x1xf32, #tpu.memory_space<vmem>>, %arg4: memref<8x72xf32, #tpu.memory_space<vmem>>, %arg5: memref<8x1xf32, #tpu.memory_space<vmem>>, %arg6: memref<2x8x256xf32, #tpu.memory_space<vmem>>) attributes {dimension_semantics = [#tpu.dimension_semantics<parallel>], iteration_bounds = array<i64: 2>, scalar_prefetch = 0 : i64, scratch_operands = 0 : i64, tpu.core_type = #tpu.core_type<tc>, window_params = [{transform_indices = @transform_0, window_bounds = array<i64: 2, 8, 256>}, {pipeline_mode = #tpu.pipeline_mode<synchronous>, transform_indices = @transform_1, window_bounds = array<i64: 8, 72>}, {pipeline_mode = #tpu.pipeline_mode<synchronous>, transform_indices = @transform_2, window_bounds = array<i64: 8, 1>}, {pipeline_mode = #tpu.pipeline_mode<synchronous>, transform_indices = @transform_3, window_bounds = array<i64: 8, 72>}, {pipeline_mode = #tpu.pipeline_mode<synchronous>, transform_indices = @transform_4, window_bounds = array<i64: 8, 1>}, {transform_indices = @transform_5, window_bounds = array<i64: 2, 8, 256>}]} {
    %c0 = arith.constant 0 : index
    %c0_0 = arith.constant 0 : index
    %c0_1 = arith.constant 0 : index
    %0 = vector.load %arg1[%c0, %c0_0, %c0_1] : memref<2x8x256xf32, #tpu.memory_space<vmem>>, vector<1x8x256xf32>
    %1 = vector.shape_cast %0 : vector<1x8x256xf32> to vector<8x256xf32>
    %c1 = arith.constant 1 : index
    %c0_2 = arith.constant 0 : index
    %c0_3 = arith.constant 0 : index
    %2 = vector.load %arg1[%c1, %c0_2, %c0_3] : memref<2x8x256xf32, #tpu.memory_space<vmem>>, vector<1x8x256xf32>
    %3 = vector.shape_cast %2 : vector<1x8x256xf32> to vector<8x256xf32>
    %4 = tpu.concatenate %1, %3 in 1 : vector<8x256xf32>, vector<8x256xf32> -> vector<8x512xf32>
    %5 = tpu.iota {dimensions = array<i32: 1>} : vector<1x512xi32>
    %c15_i32 = arith.constant 15 : i32
    %6 = vector.broadcast %c15_i32 : i32 to vector<1x512xi32>
    %7 = arith.andi %5, %6 : vector<1x512xi32>
    %c255_i32 = arith.constant 255 : i32
    %8 = vector.broadcast %c255_i32 : i32 to vector<1x512xi32>
    %9 = arith.andi %5, %8 : vector<1x512xi32>
    %c4_i32 = arith.constant 4 : i32
    %10 = vector.broadcast %c4_i32 : i32 to vector<1x512xi32>
    %11 = arith.shrsi %9, %10 : vector<1x512xi32>
    %c1_i32 = arith.constant 1 : i32
    %12 = vector.broadcast %c1_i32 : i32 to vector<1x512xi32>
    %13 = arith.cmpi sge, %11, %12 : vector<1x512xi32>
    %c14_i32 = arith.constant 14 : i32
    %14 = vector.broadcast %c14_i32 : i32 to vector<1x512xi32>
    %15 = arith.cmpi sle, %11, %14 : vector<1x512xi32>
    %c1_i32_4 = arith.constant 1 : i32
    %16 = vector.broadcast %c1_i32_4 : i32 to vector<1x512xi32>
    %17 = arith.cmpi sge, %7, %16 : vector<1x512xi32>
    %c14_i32_5 = arith.constant 14 : i32
    %18 = vector.broadcast %c14_i32_5 : i32 to vector<1x512xi32>
    %19 = arith.cmpi sle, %7, %18 : vector<1x512xi32>
    %20 = arith.andi %13, %17 : vector<1x512xi1>
    %cst = arith.constant 1.000000e+00 : f32
    %cst_6 = arith.constant 0.000000e+00 : f32
    %21 = vector.broadcast %cst : f32 to vector<1x512xf32>
    %22 = vector.broadcast %cst_6 : f32 to vector<1x512xf32>
    %23 = arith.select %20, %21, %22 : vector<1x512xi1>, vector<1x512xf32>
    %cst_7 = arith.constant 1.000000e+00 : f32
    %cst_8 = arith.constant 0.000000e+00 : f32
    %24 = vector.broadcast %cst_7 : f32 to vector<1x512xf32>
    %25 = vector.broadcast %cst_8 : f32 to vector<1x512xf32>
    %26 = arith.select %13, %24, %25 : vector<1x512xi1>, vector<1x512xf32>
    %27 = arith.andi %13, %19 : vector<1x512xi1>
    %cst_9 = arith.constant 1.000000e+00 : f32
    %cst_10 = arith.constant 0.000000e+00 : f32
    %28 = vector.broadcast %cst_9 : f32 to vector<1x512xf32>
    %29 = vector.broadcast %cst_10 : f32 to vector<1x512xf32>
    %30 = arith.select %27, %28, %29 : vector<1x512xi1>, vector<1x512xf32>
    %cst_11 = arith.constant 1.000000e+00 : f32
    %cst_12 = arith.constant 0.000000e+00 : f32
    %31 = vector.broadcast %cst_11 : f32 to vector<1x512xf32>
    %32 = vector.broadcast %cst_12 : f32 to vector<1x512xf32>
    %33 = arith.select %17, %31, %32 : vector<1x512xi1>, vector<1x512xf32>
    %cst_13 = arith.constant 1.000000e+00 : f32
    %cst_14 = arith.constant 0.000000e+00 : f32
    %34 = vector.broadcast %cst_13 : f32 to vector<1x512xf32>
    %35 = vector.broadcast %cst_14 : f32 to vector<1x512xf32>
    %36 = arith.select %19, %34, %35 : vector<1x512xi1>, vector<1x512xf32>
    %37 = arith.andi %15, %17 : vector<1x512xi1>
    %cst_15 = arith.constant 1.000000e+00 : f32
    %cst_16 = arith.constant 0.000000e+00 : f32
    %38 = vector.broadcast %cst_15 : f32 to vector<1x512xf32>
    %39 = vector.broadcast %cst_16 : f32 to vector<1x512xf32>
    %40 = arith.select %37, %38, %39 : vector<1x512xi1>, vector<1x512xf32>
    %cst_17 = arith.constant 1.000000e+00 : f32
    %cst_18 = arith.constant 0.000000e+00 : f32
    %41 = vector.broadcast %cst_17 : f32 to vector<1x512xf32>
    %42 = vector.broadcast %cst_18 : f32 to vector<1x512xf32>
    %43 = arith.select %15, %41, %42 : vector<1x512xi1>, vector<1x512xf32>
    %44 = arith.andi %15, %19 : vector<1x512xi1>
    %cst_19 = arith.constant 1.000000e+00 : f32
    %cst_20 = arith.constant 0.000000e+00 : f32
    %45 = vector.broadcast %cst_19 : f32 to vector<1x512xf32>
    %46 = vector.broadcast %cst_20 : f32 to vector<1x512xf32>
    %47 = arith.select %44, %45, %46 : vector<1x512xi1>, vector<1x512xf32>
    %c17_i32 = arith.constant 17 : i32
    %48 = tpu.dynamic_rotate %4 by %c17_i32 dim 1 : vector<8x512xf32>, i32 -> vector<8x512xf32>
    %49 = vector.broadcast %23 : vector<1x512xf32> to vector<8x512xf32>
    %50 = arith.mulf %48, %49 : vector<8x512xf32>
    %c16_i32 = arith.constant 16 : i32
    %51 = tpu.dynamic_rotate %4 by %c16_i32 dim 1 : vector<8x512xf32>, i32 -> vector<8x512xf32>
    %52 = vector.broadcast %26 : vector<1x512xf32> to vector<8x512xf32>
    %53 = arith.mulf %51, %52 : vector<8x512xf32>
    %c15_i32_21 = arith.constant 15 : i32
    %54 = tpu.dynamic_rotate %4 by %c15_i32_21 dim 1 : vector<8x512xf32>, i32 -> vector<8x512xf32>
    %55 = vector.broadcast %30 : vector<1x512xf32> to vector<8x512xf32>
    %56 = arith.mulf %54, %55 : vector<8x512xf32>
    %c1_i32_22 = arith.constant 1 : i32
    %57 = tpu.dynamic_rotate %4 by %c1_i32_22 dim 1 : vector<8x512xf32>, i32 -> vector<8x512xf32>
    %58 = vector.broadcast %33 : vector<1x512xf32> to vector<8x512xf32>
    %59 = arith.mulf %57, %58 : vector<8x512xf32>
    %c511_i32 = arith.constant 511 : i32
    %60 = tpu.dynamic_rotate %4 by %c511_i32 dim 1 : vector<8x512xf32>, i32 -> vector<8x512xf32>
    %61 = vector.broadcast %36 : vector<1x512xf32> to vector<8x512xf32>
    %62 = arith.mulf %60, %61 : vector<8x512xf32>
    %c497_i32 = arith.constant 497 : i32
    %63 = tpu.dynamic_rotate %4 by %c497_i32 dim 1 : vector<8x512xf32>, i32 -> vector<8x512xf32>
    %64 = vector.broadcast %40 : vector<1x512xf32> to vector<8x512xf32>
    %65 = arith.mulf %63, %64 : vector<8x512xf32>
    %c496_i32 = arith.constant 496 : i32
    %66 = tpu.dynamic_rotate %4 by %c496_i32 dim 1 : vector<8x512xf32>, i32 -> vector<8x512xf32>
    %67 = vector.broadcast %43 : vector<1x512xf32> to vector<8x512xf32>
    %68 = arith.mulf %66, %67 : vector<8x512xf32>
    %c495_i32 = arith.constant 495 : i32
    %69 = tpu.dynamic_rotate %4 by %c495_i32 dim 1 : vector<8x512xf32>, i32 -> vector<8x512xf32>
    %70 = vector.broadcast %47 : vector<1x512xf32> to vector<8x512xf32>
    %71 = arith.mulf %69, %70 : vector<8x512xf32>
    %72 = tpu.concatenate %50, %53, %56, %59, %4, %62, %65, %68, %71 in 0 : vector<8x512xf32>, vector<8x512xf32>, vector<8x512xf32>, vector<8x512xf32>, vector<8x512xf32>, vector<8x512xf32>, vector<8x512xf32>, vector<8x512xf32>, vector<8x512xf32> -> vector<72x512xf32>
    %c0_23 = arith.constant 0 : index
    %c0_24 = arith.constant 0 : index
    %73 = vector.load %arg2[%c0_23, %c0_24] : memref<8x72xf32, #tpu.memory_space<vmem>>, vector<8x72xf32>
    %cst_25 = arith.constant dense<0.000000e+00> : vector<8x512xf32>
    %74 = tpu.matmul %73, %72, %cst_25 {dimension_numbers = #tpu.dot_dimension_numbers<[1], [0], [0], [1], [0, 0, 1, 1], [], []>} : vector<8x72xf32>, vector<72x512xf32>, vector<8x512xf32> -> vector<8x512xf32>
    %c0_26 = arith.constant 0 : index
    %c0_27 = arith.constant 0 : index
    %75 = vector.load %arg3[%c0_26, %c0_27] : memref<8x1xf32, #tpu.memory_space<vmem>>, vector<8x1xf32>
    %76 = vector.broadcast %75 : vector<8x1xf32> to vector<8x512xf32>
    %77 = arith.addf %74, %76 : vector<8x512xf32>
    %cst_28 = arith.constant 0.000000e+00 : f32
    %78 = vector.broadcast %cst_28 : f32 to vector<8x512xf32>
    %79 = arith.maximumf %77, %78 : vector<8x512xf32>
    %c17_i32_29 = arith.constant 17 : i32
    %80 = tpu.dynamic_rotate %79 by %c17_i32_29 dim 1 : vector<8x512xf32>, i32 -> vector<8x512xf32>
    %81 = vector.broadcast %23 : vector<1x512xf32> to vector<8x512xf32>
    %82 = arith.mulf %80, %81 : vector<8x512xf32>
    %c16_i32_30 = arith.constant 16 : i32
    %83 = tpu.dynamic_rotate %79 by %c16_i32_30 dim 1 : vector<8x512xf32>, i32 -> vector<8x512xf32>
    %84 = vector.broadcast %26 : vector<1x512xf32> to vector<8x512xf32>
    %85 = arith.mulf %83, %84 : vector<8x512xf32>
    %c15_i32_31 = arith.constant 15 : i32
    %86 = tpu.dynamic_rotate %79 by %c15_i32_31 dim 1 : vector<8x512xf32>, i32 -> vector<8x512xf32>
    %87 = vector.broadcast %30 : vector<1x512xf32> to vector<8x512xf32>
    %88 = arith.mulf %86, %87 : vector<8x512xf32>
    %c1_i32_32 = arith.constant 1 : i32
    %89 = tpu.dynamic_rotate %79 by %c1_i32_32 dim 1 : vector<8x512xf32>, i32 -> vector<8x512xf32>
    %90 = vector.broadcast %33 : vector<1x512xf32> to vector<8x512xf32>
    %91 = arith.mulf %89, %90 : vector<8x512xf32>
    %c511_i32_33 = arith.constant 511 : i32
    %92 = tpu.dynamic_rotate %79 by %c511_i32_33 dim 1 : vector<8x512xf32>, i32 -> vector<8x512xf32>
    %93 = vector.broadcast %36 : vector<1x512xf32> to vector<8x512xf32>
    %94 = arith.mulf %92, %93 : vector<8x512xf32>
    %c497_i32_34 = arith.constant 497 : i32
    %95 = tpu.dynamic_rotate %79 by %c497_i32_34 dim 1 : vector<8x512xf32>, i32 -> vector<8x512xf32>
    %96 = vector.broadcast %40 : vector<1x512xf32> to vector<8x512xf32>
    %97 = arith.mulf %95, %96 : vector<8x512xf32>
    %c496_i32_35 = arith.constant 496 : i32
    %98 = tpu.dynamic_rotate %79 by %c496_i32_35 dim 1 : vector<8x512xf32>, i32 -> vector<8x512xf32>
    %99 = vector.broadcast %43 : vector<1x512xf32> to vector<8x512xf32>
    %100 = arith.mulf %98, %99 : vector<8x512xf32>
    %c495_i32_36 = arith.constant 495 : i32
    %101 = tpu.dynamic_rotate %79 by %c495_i32_36 dim 1 : vector<8x512xf32>, i32 -> vector<8x512xf32>
    %102 = vector.broadcast %47 : vector<1x512xf32> to vector<8x512xf32>
    %103 = arith.mulf %101, %102 : vector<8x512xf32>
    %104 = tpu.concatenate %82, %85, %88, %91, %79, %94, %97, %100, %103 in 0 : vector<8x512xf32>, vector<8x512xf32>, vector<8x512xf32>, vector<8x512xf32>, vector<8x512xf32>, vector<8x512xf32>, vector<8x512xf32>, vector<8x512xf32>, vector<8x512xf32> -> vector<72x512xf32>
    %c0_37 = arith.constant 0 : index
    %c0_38 = arith.constant 0 : index
    %105 = vector.load %arg4[%c0_37, %c0_38] : memref<8x72xf32, #tpu.memory_space<vmem>>, vector<8x72xf32>
    %cst_39 = arith.constant dense<0.000000e+00> : vector<8x512xf32>
    %106 = tpu.matmul %105, %104, %cst_39 {dimension_numbers = #tpu.dot_dimension_numbers<[1], [0], [0], [1], [0, 0, 1, 1], [], []>} : vector<8x72xf32>, vector<72x512xf32>, vector<8x512xf32> -> vector<8x512xf32>
    %c0_40 = arith.constant 0 : index
    %c0_41 = arith.constant 0 : index
    %107 = vector.load %arg5[%c0_40, %c0_41] : memref<8x1xf32, #tpu.memory_space<vmem>>, vector<8x1xf32>
    %108 = vector.broadcast %107 : vector<8x1xf32> to vector<8x512xf32>
    %109 = arith.addf %106, %108 : vector<8x512xf32>
    %110 = arith.addf %109, %4 : vector<8x512xf32>
    %cst_42 = arith.constant 0.000000e+00 : f32
    %111 = vector.broadcast %cst_42 : f32 to vector<8x512xf32>
    %112 = arith.maximumf %110, %111 : vector<8x512xf32>
    %113 = vector.extract_strided_slice %112 {offsets = [0, 0], sizes = [8, 256], strides = [1, 1]} : vector<8x512xf32> to vector<8x256xf32>
    %c0_43 = arith.constant 0 : index
    %c0_44 = arith.constant 0 : index
    %c0_45 = arith.constant 0 : index
    %114 = vector.load %arg6[%c0_43, %c0_44, %c0_45] : memref<2x8x256xf32, #tpu.memory_space<vmem>>, vector<1x8x256xf32>
    %115 = vector.shape_cast %114 : vector<1x8x256xf32> to vector<8x256xf32>
    %116 = vector.shape_cast %113 : vector<8x256xf32> to vector<1x8x256xf32>
    tpu.vector_store %arg6[%c0_43, %c0_44, %c0_45], %116 {strides = array<i32>} : memref<2x8x256xf32, #tpu.memory_space<vmem>>, vector<1x8x256xf32>,
    %117 = vector.extract_strided_slice %112 {offsets = [0, 256], sizes = [8, 256], strides = [1, 1]} : vector<8x512xf32> to vector<8x256xf32>
    %c1_46 = arith.constant 1 : index
    %c0_47 = arith.constant 0 : index
    %c0_48 = arith.constant 0 : index
    %118 = vector.load %arg6[%c1_46, %c0_47, %c0_48] : memref<2x8x256xf32, #tpu.memory_space<vmem>>, vector<1x8x256xf32>
    %119 = vector.shape_cast %118 : vector<1x8x256xf32> to vector<8x256xf32>
    %120 = vector.shape_cast %117 : vector<8x256xf32> to vector<1x8x256xf32>
    tpu.vector_store %arg6[%c1_46, %c0_47, %c0_48], %120 {strides = array<i32>} : memref<2x8x256xf32, #tpu.memory_space<vmem>>, vector<1x8x256xf32>,
    return
  }
  func.func @transform_0(%arg0: i32) -> (i32, i32, i32) {
    %c0_i32 = arith.constant 0 : i32
    %c0_i32_0 = arith.constant 0 : i32
    %c0_i32_1 = arith.constant 0 : i32
    return %arg0, %c0_i32, %c0_i32_0 : i32, i32, i32
  }
  func.func @transform_1(%arg0: i32) -> (i32, i32) {
    %c0_i32 = arith.constant 0 : i32
    %c0_i32_0 = arith.constant 0 : i32
    %c0_i32_1 = arith.constant 0 : i32
    return %c0_i32, %c0_i32_0 : i32, i32
  }
  func.func @transform_2(%arg0: i32) -> (i32, i32) {
    %c0_i32 = arith.constant 0 : i32
    %c0_i32_0 = arith.constant 0 : i32
    %c0_i32_1 = arith.constant 0 : i32
    return %c0_i32, %c0_i32_0 : i32, i32
  }
  func.func @transform_3(%arg0: i32) -> (i32, i32) {
    %c0_i32 = arith.constant 0 : i32
    %c0_i32_0 = arith.constant 0 : i32
    %c0_i32_1 = arith.constant 0 : i32
    return %c0_i32, %c0_i32_0 : i32, i32
  }
  func.func @transform_4(%arg0: i32) -> (i32, i32) {
    %c0_i32 = arith.constant 0 : i32
    %c0_i32_0 = arith.constant 0 : i32
    %c0_i32_1 = arith.constant 0 : i32
    return %c0_i32, %c0_i32_0 : i32, i32
  }
  func.func @transform_5(%arg0: i32) -> (i32, i32, i32) {
    %c0_i32 = arith.constant 0 : i32
    %c0_i32_0 = arith.constant 0 : i32
    %c0_i32_1 = arith.constant 0 : i32
    return %arg0, %c0_i32, %c0_i32_0 : i32, i32, i32
  }
}

module attributes {stable_mosaic.version = 11 : i64} {
  func.func @_block_kernel(%arg0: i32, %arg1: memref<2x8x256xf32, #tpu.memory_space<vmem>>, %arg2: memref<8x72xf32, #tpu.memory_space<vmem>>, %arg3: memref<8x1xf32, #tpu.memory_space<vmem>>, %arg4: memref<8x72xf32, #tpu.memory_space<vmem>>, %arg5: memref<8x1xf32, #tpu.memory_space<vmem>>, %arg6: memref<2x8x256xf32, #tpu.memory_space<vmem>>) attributes {dimension_semantics = [#tpu.dimension_semantics<parallel>], iteration_bounds = array<i64: 2>, scalar_prefetch = 0 : i64, scratch_operands = 0 : i64, tpu.core_type = #tpu.core_type<tc>, window_params = [{transform_indices = @transform_0, window_bounds = array<i64: 2, 8, 256>}, {pipeline_mode = #tpu.pipeline_mode<synchronous>, transform_indices = @transform_1, window_bounds = array<i64: 8, 72>}, {pipeline_mode = #tpu.pipeline_mode<synchronous>, transform_indices = @transform_2, window_bounds = array<i64: 8, 1>}, {pipeline_mode = #tpu.pipeline_mode<synchronous>, transform_indices = @transform_3, window_bounds = array<i64: 8, 72>}, {pipeline_mode = #tpu.pipeline_mode<synchronous>, transform_indices = @transform_4, window_bounds = array<i64: 8, 1>}, {transform_indices = @transform_5, window_bounds = array<i64: 2, 8, 256>}]} {
    %c0 = arith.constant 0 : index
    %c0_0 = arith.constant 0 : index
    %c0_1 = arith.constant 0 : index
    %0 = vector.load %arg1[%c0, %c0_0, %c0_1] : memref<2x8x256xf32, #tpu.memory_space<vmem>>, vector<1x8x256xf32>
    %1 = vector.shape_cast %0 : vector<1x8x256xf32> to vector<8x256xf32>
    %c1 = arith.constant 1 : index
    %c0_2 = arith.constant 0 : index
    %c0_3 = arith.constant 0 : index
    %2 = vector.load %arg1[%c1, %c0_2, %c0_3] : memref<2x8x256xf32, #tpu.memory_space<vmem>>, vector<1x8x256xf32>
    %3 = vector.shape_cast %2 : vector<1x8x256xf32> to vector<8x256xf32>
    %4 = tpu.concatenate %1, %3 in 1 : vector<8x256xf32>, vector<8x256xf32> -> vector<8x512xf32>
    %5 = tpu.iota {dimensions = array<i32: 1>} : vector<1x512xi32>
    %c15_i32 = arith.constant 15 : i32
    %6 = vector.broadcast %c15_i32 : i32 to vector<1x512xi32>
    %7 = arith.andi %5, %6 : vector<1x512xi32>
    %c255_i32 = arith.constant 255 : i32
    %8 = vector.broadcast %c255_i32 : i32 to vector<1x512xi32>
    %9 = arith.andi %5, %8 : vector<1x512xi32>
    %c4_i32 = arith.constant 4 : i32
    %10 = vector.broadcast %c4_i32 : i32 to vector<1x512xi32>
    %11 = arith.shrsi %9, %10 : vector<1x512xi32>
    %c1_i32 = arith.constant 1 : i32
    %12 = vector.broadcast %c1_i32 : i32 to vector<1x512xi32>
    %13 = arith.cmpi sge, %11, %12 : vector<1x512xi32>
    %c14_i32 = arith.constant 14 : i32
    %14 = vector.broadcast %c14_i32 : i32 to vector<1x512xi32>
    %15 = arith.cmpi sle, %11, %14 : vector<1x512xi32>
    %c1_i32_4 = arith.constant 1 : i32
    %16 = vector.broadcast %c1_i32_4 : i32 to vector<1x512xi32>
    %17 = arith.cmpi sge, %7, %16 : vector<1x512xi32>
    %c14_i32_5 = arith.constant 14 : i32
    %18 = vector.broadcast %c14_i32_5 : i32 to vector<1x512xi32>
    %19 = arith.cmpi sle, %7, %18 : vector<1x512xi32>
    %20 = arith.andi %13, %17 : vector<1x512xi1>
    %cst = arith.constant 1.000000e+00 : f32
    %cst_6 = arith.constant 0.000000e+00 : f32
    %21 = vector.broadcast %cst : f32 to vector<1x512xf32>
    %22 = vector.broadcast %cst_6 : f32 to vector<1x512xf32>
    %23 = arith.select %20, %21, %22 : vector<1x512xi1>, vector<1x512xf32>
    %cst_7 = arith.constant 1.000000e+00 : f32
    %cst_8 = arith.constant 0.000000e+00 : f32
    %24 = vector.broadcast %cst_7 : f32 to vector<1x512xf32>
    %25 = vector.broadcast %cst_8 : f32 to vector<1x512xf32>
    %26 = arith.select %13, %24, %25 : vector<1x512xi1>, vector<1x512xf32>
    %27 = arith.andi %13, %19 : vector<1x512xi1>
    %cst_9 = arith.constant 1.000000e+00 : f32
    %cst_10 = arith.constant 0.000000e+00 : f32
    %28 = vector.broadcast %cst_9 : f32 to vector<1x512xf32>
    %29 = vector.broadcast %cst_10 : f32 to vector<1x512xf32>
    %30 = arith.select %27, %28, %29 : vector<1x512xi1>, vector<1x512xf32>
    %cst_11 = arith.constant 1.000000e+00 : f32
    %cst_12 = arith.constant 0.000000e+00 : f32
    %31 = vector.broadcast %cst_11 : f32 to vector<1x512xf32>
    %32 = vector.broadcast %cst_12 : f32 to vector<1x512xf32>
    %33 = arith.select %17, %31, %32 : vector<1x512xi1>, vector<1x512xf32>
    %cst_13 = arith.constant 1.000000e+00 : f32
    %cst_14 = arith.constant 0.000000e+00 : f32
    %34 = vector.broadcast %cst_13 : f32 to vector<1x512xf32>
    %35 = vector.broadcast %cst_14 : f32 to vector<1x512xf32>
    %36 = arith.select %19, %34, %35 : vector<1x512xi1>, vector<1x512xf32>
    %37 = arith.andi %15, %17 : vector<1x512xi1>
    %cst_15 = arith.constant 1.000000e+00 : f32
    %cst_16 = arith.constant 0.000000e+00 : f32
    %38 = vector.broadcast %cst_15 : f32 to vector<1x512xf32>
    %39 = vector.broadcast %cst_16 : f32 to vector<1x512xf32>
    %40 = arith.select %37, %38, %39 : vector<1x512xi1>, vector<1x512xf32>
    %cst_17 = arith.constant 1.000000e+00 : f32
    %cst_18 = arith.constant 0.000000e+00 : f32
    %41 = vector.broadcast %cst_17 : f32 to vector<1x512xf32>
    %42 = vector.broadcast %cst_18 : f32 to vector<1x512xf32>
    %43 = arith.select %15, %41, %42 : vector<1x512xi1>, vector<1x512xf32>
    %44 = arith.andi %15, %19 : vector<1x512xi1>
    %cst_19 = arith.constant 1.000000e+00 : f32
    %cst_20 = arith.constant 0.000000e+00 : f32
    %45 = vector.broadcast %cst_19 : f32 to vector<1x512xf32>
    %46 = vector.broadcast %cst_20 : f32 to vector<1x512xf32>
    %47 = arith.select %44, %45, %46 : vector<1x512xi1>, vector<1x512xf32>
    %c17_i32 = arith.constant 17 : i32
    %48 = tpu.dynamic_rotate %4 by %c17_i32 dim 1 : vector<8x512xf32>, i32 -> vector<8x512xf32>
    %49 = vector.broadcast %23 : vector<1x512xf32> to vector<8x512xf32>
    %50 = arith.mulf %48, %49 : vector<8x512xf32>
    %c16_i32 = arith.constant 16 : i32
    %51 = tpu.dynamic_rotate %4 by %c16_i32 dim 1 : vector<8x512xf32>, i32 -> vector<8x512xf32>
    %52 = vector.broadcast %26 : vector<1x512xf32> to vector<8x512xf32>
    %53 = arith.mulf %51, %52 : vector<8x512xf32>
    %c15_i32_21 = arith.constant 15 : i32
    %54 = tpu.dynamic_rotate %4 by %c15_i32_21 dim 1 : vector<8x512xf32>, i32 -> vector<8x512xf32>
    %55 = vector.broadcast %30 : vector<1x512xf32> to vector<8x512xf32>
    %56 = arith.mulf %54, %55 : vector<8x512xf32>
    %c1_i32_22 = arith.constant 1 : i32
    %57 = tpu.dynamic_rotate %4 by %c1_i32_22 dim 1 : vector<8x512xf32>, i32 -> vector<8x512xf32>
    %58 = vector.broadcast %33 : vector<1x512xf32> to vector<8x512xf32>
    %59 = arith.mulf %57, %58 : vector<8x512xf32>
    %c511_i32 = arith.constant 511 : i32
    %60 = tpu.dynamic_rotate %4 by %c511_i32 dim 1 : vector<8x512xf32>, i32 -> vector<8x512xf32>
    %61 = vector.broadcast %36 : vector<1x512xf32> to vector<8x512xf32>
    %62 = arith.mulf %60, %61 : vector<8x512xf32>
    %c497_i32 = arith.constant 497 : i32
    %63 = tpu.dynamic_rotate %4 by %c497_i32 dim 1 : vector<8x512xf32>, i32 -> vector<8x512xf32>
    %64 = vector.broadcast %40 : vector<1x512xf32> to vector<8x512xf32>
    %65 = arith.mulf %63, %64 : vector<8x512xf32>
    %c496_i32 = arith.constant 496 : i32
    %66 = tpu.dynamic_rotate %4 by %c496_i32 dim 1 : vector<8x512xf32>, i32 -> vector<8x512xf32>
    %67 = vector.broadcast %43 : vector<1x512xf32> to vector<8x512xf32>
    %68 = arith.mulf %66, %67 : vector<8x512xf32>
    %c495_i32 = arith.constant 495 : i32
    %69 = tpu.dynamic_rotate %4 by %c495_i32 dim 1 : vector<8x512xf32>, i32 -> vector<8x512xf32>
    %70 = vector.broadcast %47 : vector<1x512xf32> to vector<8x512xf32>
    %71 = arith.mulf %69, %70 : vector<8x512xf32>
    %72 = tpu.concatenate %50, %53, %56, %59, %4, %62, %65, %68, %71 in 0 : vector<8x512xf32>, vector<8x512xf32>, vector<8x512xf32>, vector<8x512xf32>, vector<8x512xf32>, vector<8x512xf32>, vector<8x512xf32>, vector<8x512xf32>, vector<8x512xf32> -> vector<72x512xf32>
    %c0_23 = arith.constant 0 : index
    %c0_24 = arith.constant 0 : index
    %73 = vector.load %arg2[%c0_23, %c0_24] : memref<8x72xf32, #tpu.memory_space<vmem>>, vector<8x72xf32>
    %cst_25 = arith.constant dense<0.000000e+00> : vector<8x512xf32>
    %74 = tpu.matmul %73, %72, %cst_25 {dimension_numbers = #tpu.dot_dimension_numbers<[1], [0], [0], [1], [0, 0, 1, 1], [], []>} : vector<8x72xf32>, vector<72x512xf32>, vector<8x512xf32> -> vector<8x512xf32>
    %c0_26 = arith.constant 0 : index
    %c0_27 = arith.constant 0 : index
    %75 = vector.load %arg3[%c0_26, %c0_27] : memref<8x1xf32, #tpu.memory_space<vmem>>, vector<8x1xf32>
    %76 = vector.broadcast %75 : vector<8x1xf32> to vector<8x512xf32>
    %77 = arith.addf %74, %76 : vector<8x512xf32>
    %cst_28 = arith.constant 0.000000e+00 : f32
    %78 = vector.broadcast %cst_28 : f32 to vector<8x512xf32>
    %79 = arith.maximumf %77, %78 : vector<8x512xf32>
    %c17_i32_29 = arith.constant 17 : i32
    %80 = tpu.dynamic_rotate %79 by %c17_i32_29 dim 1 : vector<8x512xf32>, i32 -> vector<8x512xf32>
    %81 = vector.broadcast %23 : vector<1x512xf32> to vector<8x512xf32>
    %82 = arith.mulf %80, %81 : vector<8x512xf32>
    %c16_i32_30 = arith.constant 16 : i32
    %83 = tpu.dynamic_rotate %79 by %c16_i32_30 dim 1 : vector<8x512xf32>, i32 -> vector<8x512xf32>
    %84 = vector.broadcast %26 : vector<1x512xf32> to vector<8x512xf32>
    %85 = arith.mulf %83, %84 : vector<8x512xf32>
    %c15_i32_31 = arith.constant 15 : i32
    %86 = tpu.dynamic_rotate %79 by %c15_i32_31 dim 1 : vector<8x512xf32>, i32 -> vector<8x512xf32>
    %87 = vector.broadcast %30 : vector<1x512xf32> to vector<8x512xf32>
    %88 = arith.mulf %86, %87 : vector<8x512xf32>
    %c1_i32_32 = arith.constant 1 : i32
    %89 = tpu.dynamic_rotate %79 by %c1_i32_32 dim 1 : vector<8x512xf32>, i32 -> vector<8x512xf32>
    %90 = vector.broadcast %33 : vector<1x512xf32> to vector<8x512xf32>
    %91 = arith.mulf %89, %90 : vector<8x512xf32>
    %c511_i32_33 = arith.constant 511 : i32
    %92 = tpu.dynamic_rotate %79 by %c511_i32_33 dim 1 : vector<8x512xf32>, i32 -> vector<8x512xf32>
    %93 = vector.broadcast %36 : vector<1x512xf32> to vector<8x512xf32>
    %94 = arith.mulf %92, %93 : vector<8x512xf32>
    %c497_i32_34 = arith.constant 497 : i32
    %95 = tpu.dynamic_rotate %79 by %c497_i32_34 dim 1 : vector<8x512xf32>, i32 -> vector<8x512xf32>
    %96 = vector.broadcast %40 : vector<1x512xf32> to vector<8x512xf32>
    %97 = arith.mulf %95, %96 : vector<8x512xf32>
    %c496_i32_35 = arith.constant 496 : i32
    %98 = tpu.dynamic_rotate %79 by %c496_i32_35 dim 1 : vector<8x512xf32>, i32 -> vector<8x512xf32>
    %99 = vector.broadcast %43 : vector<1x512xf32> to vector<8x512xf32>
    %100 = arith.mulf %98, %99 : vector<8x512xf32>
    %c495_i32_36 = arith.constant 495 : i32
    %101 = tpu.dynamic_rotate %79 by %c495_i32_36 dim 1 : vector<8x512xf32>, i32 -> vector<8x512xf32>
    %102 = vector.broadcast %47 : vector<1x512xf32> to vector<8x512xf32>
    %103 = arith.mulf %101, %102 : vector<8x512xf32>
    %104 = tpu.concatenate %82, %85, %88, %91, %79, %94, %97, %100, %103 in 0 : vector<8x512xf32>, vector<8x512xf32>, vector<8x512xf32>, vector<8x512xf32>, vector<8x512xf32>, vector<8x512xf32>, vector<8x512xf32>, vector<8x512xf32>, vector<8x512xf32> -> vector<72x512xf32>
    %c0_37 = arith.constant 0 : index
    %c0_38 = arith.constant 0 : index
    %105 = vector.load %arg4[%c0_37, %c0_38] : memref<8x72xf32, #tpu.memory_space<vmem>>, vector<8x72xf32>
    %cst_39 = arith.constant dense<0.000000e+00> : vector<8x512xf32>
    %106 = tpu.matmul %105, %104, %cst_39 {dimension_numbers = #tpu.dot_dimension_numbers<[1], [0], [0], [1], [0, 0, 1, 1], [], []>} : vector<8x72xf32>, vector<72x512xf32>, vector<8x512xf32> -> vector<8x512xf32>
    %c0_40 = arith.constant 0 : index
    %c0_41 = arith.constant 0 : index
    %107 = vector.load %arg5[%c0_40, %c0_41] : memref<8x1xf32, #tpu.memory_space<vmem>>, vector<8x1xf32>
    %108 = vector.broadcast %107 : vector<8x1xf32> to vector<8x512xf32>
    %109 = arith.addf %106, %108 : vector<8x512xf32>
    %110 = arith.addf %109, %4 : vector<8x512xf32>
    %cst_42 = arith.constant 0.000000e+00 : f32
    %111 = vector.broadcast %cst_42 : f32 to vector<8x512xf32>
    %112 = arith.maximumf %110, %111 : vector<8x512xf32>
    %113 = vector.extract_strided_slice %112 {offsets = [0, 0], sizes = [8, 256], strides = [1, 1]} : vector<8x512xf32> to vector<8x256xf32>
    %c0_43 = arith.constant 0 : index
    %c0_44 = arith.constant 0 : index
    %c0_45 = arith.constant 0 : index
    %114 = vector.load %arg6[%c0_43, %c0_44, %c0_45] : memref<2x8x256xf32, #tpu.memory_space<vmem>>, vector<1x8x256xf32>
    %115 = vector.shape_cast %114 : vector<1x8x256xf32> to vector<8x256xf32>
    %116 = vector.shape_cast %113 : vector<8x256xf32> to vector<1x8x256xf32>
    tpu.vector_store %arg6[%c0_43, %c0_44, %c0_45], %116 {strides = array<i32>} : memref<2x8x256xf32, #tpu.memory_space<vmem>>, vector<1x8x256xf32>,
    %117 = vector.extract_strided_slice %112 {offsets = [0, 256], sizes = [8, 256], strides = [1, 1]} : vector<8x512xf32> to vector<8x256xf32>
    %c1_46 = arith.constant 1 : index
    %c0_47 = arith.constant 0 : index
    %c0_48 = arith.constant 0 : index
    %118 = vector.load %arg6[%c1_46, %c0_47, %c0_48] : memref<2x8x256xf32, #tpu.memory_space<vmem>>, vector<1x8x256xf32>
    %119 = vector.shape_cast %118 : vector<1x8x256xf32> to vector<8x256xf32>
    %120 = vector.shape_cast %117 : vector<8x256xf32> to vector<1x8x256xf32>
    tpu.vector_store %arg6[%c1_46, %c0_47, %c0_48], %120 {strides = array<i32>} : memref<2x8x256xf32, #tpu.memory_space<vmem>>, vector<1x8x256xf32>,
    return
  }
  func.func @transform_0(%arg0: i32) -> (i32, i32, i32) {
    %c0_i32 = arith.constant 0 : i32
    %c0_i32_0 = arith.constant 0 : i32
    %c0_i32_1 = arith.constant 0 : i32
    return %arg0, %c0_i32, %c0_i32_0 : i32, i32, i32
  }
  func.func @transform_1(%arg0: i32) -> (i32, i32) {
    %c0_i32 = arith.constant 0 : i32
    %c0_i32_0 = arith.constant 0 : i32
    %c0_i32_1 = arith.constant 0 : i32
    return %c0_i32, %c0_i32_0 : i32, i32
  }
  func.func @transform_2(%arg0: i32) -> (i32, i32) {
    %c0_i32 = arith.constant 0 : i32
    %c0_i32_0 = arith.constant 0 : i32
    %c0_i32_1 = arith.constant 0 : i32
    return %c0_i32, %c0_i32_0 : i32, i32
  }
  func.func @transform_3(%arg0: i32) -> (i32, i32) {
    %c0_i32 = arith.constant 0 : i32
    %c0_i32_0 = arith.constant 0 : i32
    %c0_i32_1 = arith.constant 0 : i32
    return %c0_i32, %c0_i32_0 : i32, i32
  }
  func.func @transform_4(%arg0: i32) -> (i32, i32) {
    %c0_i32 = arith.constant 0 : i32
    %c0_i32_0 = arith.constant 0 : i32
    %c0_i32_1 = arith.constant 0 : i32
    return %c0_i32, %c0_i32_0 : i32, i32
  }
  func.func @transform_5(%arg0: i32) -> (i32, i32, i32) {
    %c0_i32 = arith.constant 0 : i32
    %c0_i32_0 = arith.constant 0 : i32
    %c0_i32_1 = arith.constant 0 : i32
    return %arg0, %c0_i32, %c0_i32_0 : i32, i32, i32
  }
}

</mosaic_0001>

<llo_original>
// kernel: tpu_custom_call.1
$region0: #{tpu_custom_call.1}
  #allocation0 [shape = 'u32[]', space=smem, size = 0x4, offset = 0x4, fixed_abs, tag = 'smem constant byte address 0x4 - core index']
  #allocation1 [shape = 'u32[144,128]{1,0:T(1,128)}', space=vmem, size = 0x12000, scoped, tag = 'internal scratch']
  %s0 = inlined_call_operand.hbm [shape: f32[4,8,256], index: 0, kind: input, shape index: {}]
  %s1 = inlined_call_operand.vmem [shape: f32[8,72], index: 1, kind: input, shape index: {}]
  %s2 = inlined_call_operand.vmem [shape: f32[8,1], index: 2, kind: input, shape index: {}]
  %s3 = inlined_call_operand.vmem [shape: f32[8,72], index: 3, kind: input, shape index: {}]
  %s4 = inlined_call_operand.vmem [shape: f32[8,1], index: 4, kind: input, shape index: {}]
  %s5 = inlined_call_operand.hbm [shape: f32[4,8,256], index: 5, kind: output, shape index: {}]
  %s6 = sld [smem:[#allocation0]]
  $region57: #{tpu_custom_call.1} parent=0
    _
  %s8 = ssub.s32 1, %s6
  %s9 = scalar_select 0, %s8, %s6
  $region1: #{tpu_custom_call.1} parent=0
    #allocation2 [shape = 'u8[32768]{0}', space=vmem, size = 0x8000, scoped, tag = 'input window, operand 0']
    #allocation3 [shape = 's32[2]{0}', space=sflag, size = 0x8, scoped, tag = 'scoped memory for tpu_custom_call.1']
    #allocation4 [shape = 's32[2]{0}', space=sflag, size = 0x8, scoped, tag = 'scoped memory for tpu_custom_call.1']
    #allocation5 [shape = 'u8[32768]{0}', space=vmem, size = 0x8000, scoped, tag = 'output window, operand 0']
    %10 = vsyncpa [#allocation3], 0
    %s11 = scalar_lea.sflag [#allocation3], 1
    %12 = vsyncpa %s11, 0
    %13 = vsyncpa [#allocation4], 0
    %s14 = scalar_lea.sflag [#allocation4], 1
    %15 = vsyncpa %s14, 0
    loop: start=0, step=1, limit=4
    $region2: #{tpu_custom_call.1} parent=1 // loop_pre_header
      _
    $region3: #{tpu_custom_call.1} parent=1 // loop_header
      %s17 = sphi 0, %s21
      %p18 = scmp.ge.s32.totalorder %s17, 4
      %s27 = sphi 0, %s29
      %s30 = sphi 0, %s27
      %s31 = sphi 0, %s30
      %s47 = sphi 0, %s31
      %s51 = sphi 0, %s51
      %s53 = sphi 0, %s51
      %s54 = sphi 0, %s53
      %s68 = sphi 0, %s54
      %s72 = sphi 0, %s72
      %s74 = sphi 0, %s72
      %s75 = sphi 0, %s74
      %s89 = sphi 0, %s75
      %s93 = sphi 0, %s93
      %s95 = sphi 0, %s93
      %s96 = sphi 0, %s95
      %s110 = sphi 0, %s96
      %s114 = sphi 0, %s114
      %s116 = sphi 0, %s114
      %s117 = sphi 0, %s116
      %s131 = sphi 0, %s117
      %s137 = sphi 0, %s139
      %s140 = sphi 0, %s137
      %s141 = sphi 0, %s140
      %s157 = sphi 0, %s141
    $region4: #{tpu_custom_call.1} parent=1 // loop_header_branch
      %20 = sbr.rel (%p18) target = $region8
    $region5: #{tpu_custom_call.1} parent=1 // loop_body
      %s22 = ssub.s32 %s17, 1
      %s23 = ssub.s32 %s17, 2
      %s24 = sadd.s32 %s17, 1
      %s25 = ssub.s32 %s17, %s24
      %p26 = scmp.eq.s32.totalorder %s25, 0
      %s28 = sadd.s32 %s27, 1
      %s29 = scalar_select %p26, %s27, %s28
      %p32 = pneg %p26
      %p33 = scmp.eq.s32.totalorder %s17, 1
      %p34 = por %p32, %p33
      %p35 = scmp.ne.s32.totalorder %s27, %s30
      %p36 = scmp.eq.s32.totalorder %s17, 0
      %p37 = por %p35, %p36
      %p38 = scmp.ne.s32.totalorder %s27, %s30
      %p39 = scmp.eq.s32.totalorder %s22, 1
      %p40 = por %p38, %p39
      %p41 = scmp.ne.s32.totalorder %s30, %s31
      %p42 = scmp.eq.s32.totalorder %s22, 0
      %p43 = por %p41, %p42
      %p44 = scmp.ne.s32.totalorder %s30, %s31
      %p45 = scmp.eq.s32.totalorder %s23, 1
      %p46 = por %p44, %p45
      %p48 = scmp.ne.s32.totalorder %s31, %s47
      %p49 = scmp.eq.s32.totalorder %s23, 0
      %p50 = por %p48, %p49
      %s52 = sadd.s32 %s51, 1
      %p55 = scmp.eq.s32.totalorder %s17, 1
      %p56 = scmp.ne.s32.totalorder %s51, %s53
      %p57 = scmp.eq.s32.totalorder %s17, 0
      %p58 = por %p56, %p57
      %p59 = scmp.ne.s32.totalorder %s51, %s53
      %p60 = scmp.eq.s32.totalorder %s22, 1
      %p61 = por %p59, %p60
      %p62 = scmp.ne.s32.totalorder %s53, %s54
      %p63 = scmp.eq.s32.totalorder %s22, 0
      %p64 = por %p62, %p63
      %p65 = scmp.ne.s32.totalorder %s53, %s54
      %p66 = scmp.eq.s32.totalorder %s23, 1
      %p67 = por %p65, %p66
      %p69 = scmp.ne.s32.totalorder %s54, %s68
      %p70 = scmp.eq.s32.totalorder %s23, 0
      %p71 = por %p69, %p70
      %s73 = sadd.s32 %s72, 1
      %p76 = scmp.eq.s32.totalorder %s17, 1
      %p77 = scmp.ne.s32.totalorder %s72, %s74
      %p78 = scmp.eq.s32.totalorder %s17, 0
      %p79 = por %p77, %p78
      %p80 = scmp.ne.s32.totalorder %s72, %s74
      %p81 = scmp.eq.s32.totalorder %s22, 1
      %p82 = por %p80, %p81
      %p83 = scmp.ne.s32.totalorder %s74, %s75
      %p84 = scmp.eq.s32.totalorder %s22, 0
      %p85 = por %p83, %p84
      %p86 = scmp.ne.s32.totalorder %s74, %s75
      %p87 = scmp.eq.s32.totalorder %s23, 1
      %p88 = por %p86, %p87
      %p90 = scmp.ne.s32.totalorder %s75, %s89
      %p91 = scmp.eq.s32.totalorder %s23, 0
      %p92 = por %p90, %p91
      %s94 = sadd.s32 %s93, 1
      %p97 = scmp.eq.s32.totalorder %s17, 1
      %p98 = scmp.ne.s32.totalorder %s93, %s95
      %p99 = scmp.eq.s32.totalorder %s17, 0
      %p100 = por %p98, %p99
      %p101 = scmp.ne.s32.totalorder %s93, %s95
      %p102 = scmp.eq.s32.totalorder %s22, 1
      %p103 = por %p101, %p102
      %p104 = scmp.ne.s32.totalorder %s95, %s96
      %p105 = scmp.eq.s32.totalorder %s22, 0
      %p106 = por %p104, %p105
      %p107 = scmp.ne.s32.totalorder %s95, %s96
      %p108 = scmp.eq.s32.totalorder %s23, 1
      %p109 = por %p107, %p108
      %p111 = scmp.ne.s32.totalorder %s96, %s110
      %p112 = scmp.eq.s32.totalorder %s23, 0
      %p113 = por %p111, %p112
      %s115 = sadd.s32 %s114, 1
      %p118 = scmp.eq.s32.totalorder %s17, 1
      %p119 = scmp.ne.s32.totalorder %s114, %s116
      %p120 = scmp.eq.s32.totalorder %s17, 0
      %p121 = por %p119, %p120
      %p122 = scmp.ne.s32.totalorder %s114, %s116
      %p123 = scmp.eq.s32.totalorder %s22, 1
      %p124 = por %p122, %p123
      %p125 = scmp.ne.s32.totalorder %s116, %s117
      %p126 = scmp.eq.s32.totalorder %s22, 0
      %p127 = por %p125, %p126
      %p128 = scmp.ne.s32.totalorder %s116, %s117
      %p129 = scmp.eq.s32.totalorder %s23, 1
      %p130 = por %p128, %p129
      %p132 = scmp.ne.s32.totalorder %s117, %s131
      %p133 = scmp.eq.s32.totalorder %s23, 0
      %p134 = por %p132, %p133
      %s135 = ssub.s32 %s17, %s24
      %p136 = scmp.eq.s32.totalorder %s135, 0
      %s138 = sadd.s32 %s137, 1
      %s139 = scalar_select %p136, %s137, %s138
      %p142 = pneg %p136
      %p143 = scmp.eq.s32.totalorder %s17, 1
      %p144 = por %p142, %p143
      %p145 = scmp.ne.s32.totalorder %s137, %s140
      %p146 = scmp.eq.s32.totalorder %s17, 0
      %p147 = por %p145, %p146
      %p148 = scmp.ne.s32.totalorder %s137, %s140
      %p149 = scmp.eq.s32.totalorder %s22, 1
      %p150 = por %p148, %p149
      %p151 = scmp.ne.s32.totalorder %s140, %s141
      %p152 = scmp.eq.s32.totalorder %s22, 0
      %p153 = por %p151, %p152
      %p154 = scmp.ne.s32.totalorder %s140, %s141
      %p155 = scmp.eq.s32.totalorder %s23, 1
      %p156 = por %p154, %p155
      %p158 = scmp.ne.s32.totalorder %s141, %s157
      %p159 = scmp.eq.s32.totalorder %s23, 0
      %p160 = por %p158, %p159
      %p161 = scmp.le.s32.totalorder 1, %s17
      %p162 = scmp.lt.s32.totalorder %s17, 3
      %p163 = pnand %p161, %p162
      %p164 = pneg %p163
      // Predicated region
      $region9: #{tpu_custom_call.1} parent=5 // pred_check
        _
      $region10: #{tpu_custom_call.1} parent=5 // pred_check_branch
        %166 = sbr.rel (%p163) target = $region12
      $region11: #{tpu_custom_call.1} parent=5 // pred_region
        %s167 = ssub.s32 %s17, 1
        // Predicated region
        $region13: #{tpu_custom_call.1} parent=11 // pred_check
          %p168 = pneg %p64
        $region14: #{tpu_custom_call.1} parent=11 // pred_check_branch
          %170 = sbr.rel (%p168) target = $region16
        $region15: #{tpu_custom_call.1} parent=11 // pred_region
          _
        $region16: #{tpu_custom_call.1} parent=11 // pred_fallthru
          _
        // Predicated region
        $region17: #{tpu_custom_call.1} parent=11 // pred_check
          %p171 = pneg %p85
        $region18: #{tpu_custom_call.1} parent=11 // pred_check_branch
          %173 = sbr.rel (%p171) target = $region20
        $region19: #{tpu_custom_call.1} parent=11 // pred_region
          _
        $region20: #{tpu_custom_call.1} parent=11 // pred_fallthru
          _
        // Predicated region
        $region21: #{tpu_custom_call.1} parent=11 // pred_check
          %p174 = pneg %p106
        $region22: #{tpu_custom_call.1} parent=11 // pred_check_branch
          %176 = sbr.rel (%p174) target = $region24
        $region23: #{tpu_custom_call.1} parent=11 // pred_region
          _
        $region24: #{tpu_custom_call.1} parent=11 // pred_fallthru
          _
        // Predicated region
        $region25: #{tpu_custom_call.1} parent=11 // pred_check
          %p177 = pneg %p127
        $region26: #{tpu_custom_call.1} parent=11 // pred_check_branch
          %179 = sbr.rel (%p177) target = $region28
        $region27: #{tpu_custom_call.1} parent=11 // pred_region
          _
        $region28: #{tpu_custom_call.1} parent=11 // pred_fallthru
          _
      $region12: #{tpu_custom_call.1} parent=5 // pred_fallthru
        _
      %p180 = scmp.lt.s32.totalorder %s17, 2
      // Predicated region
      $region29: #{tpu_custom_call.1} parent=5 // pred_check
        %p181 = pneg %p180
      $region30: #{tpu_custom_call.1} parent=5 // pred_check_branch
        %183 = sbr.rel (%p181) target = $region32
      $region31: #{tpu_custom_call.1} parent=5 // pred_region
        // Predicated region
        $region33: #{tpu_custom_call.1} parent=31 // pred_check
          %p184 = pneg %p37
        $region34: #{tpu_custom_call.1} parent=31 // pred_check_branch
          %186 = sbr.rel (%p184) target = $region36
        $region35: #{tpu_custom_call.1} parent=31 // pred_region
          %s187 = sand.u32 %s27, 1
          %s188 = scalar_lea.sflag [#allocation3], %s187
          %s189 = sand.u32 %s27, 1
          %s190 = smul.addr %s189, 32
          %s191 = scalar_lea.vmem [#allocation2], %s190
          %s192 = smul.u32 2, %s17
          %s194 = ssub.s32 512, 512
          %195 = vsyncadd %s188, %s194
          %s196 = smul.addr %s192, 2
          %s197 = smul.addr %s196, 128
          %s198 = scalar_lea.hbm %s0, %s197
          %s199 = sshll.u32 %s191, 4
          %s200 = int_to_ptr.vmem [resolvable:$true] %s199
          %205 = dma.hbm_to_vmem [thread:$0]  %s198, 512, %s200, %s188, 256, 256, 16
        $region36: #{tpu_custom_call.1} parent=31 // pred_fallthru
          _
      $region32: #{tpu_custom_call.1} parent=5 // pred_fallthru
        _
      %p206 = scmp.le.s32.totalorder 1, %s17
      %p207 = scmp.lt.s32.totalorder %s17, 3
      %p208 = pnand %p206, %p207
      %p209 = pneg %p208
      // Predicated region
      $region37: #{tpu_custom_call.1} parent=5 // pred_check
        _
      $region38: #{tpu_custom_call.1} parent=5 // pred_check_branch
        %211 = sbr.rel (%p208) target = $region40
      $region39: #{tpu_custom_call.1} parent=5 // pred_region
        %s212 = ssub.s32 %s17, 1
        %s213 = sand.u32 %s30, 1
        %s214 = scalar_lea.sflag [#allocation3], %s213
        %s215 = sand.u32 %s30, 1
        %s216 = smul.addr %s215, 32
        %s217 = scalar_lea.vmem [#allocation2], %s216
        // Predicated region
        $region41: #{tpu_custom_call.1} parent=39 // pred_check
          %p218 = pneg %p43
        $region42: #{tpu_custom_call.1} parent=39 // pred_check_branch
          %220 = sbr.rel (%p218) target = $region44
        $region43: #{tpu_custom_call.1} parent=39 // pred_region
          %221 = dma.done %s214, 512
        $region44: #{tpu_custom_call.1} parent=39 // pred_fallthru
          _
        %s222 = sand.u32 %s30, 1
        %s223 = scalar_lea.sflag [#allocation3], %s222
        %s224 = sand.u32 %s30, 1
        %s225 = smul.addr %s224, 32
        %s226 = scalar_lea.vmem [#allocation2], %s225
        %p227 = pneg %p43
        %p228 = pneg %p40
        %p229 = pneg %p64
        %p230 = pneg %p61
        %p231 = pneg %p85
        %p232 = pneg %p82
        %p233 = pneg %p106
        %p234 = pneg %p103
        %p235 = pneg %p127
        %p236 = pneg %p124
        %p237 = pneg %p153
        %p238 = pneg %p150
        %s239 = sand.u32 %s140, 1
        %s240 = scalar_lea.sflag [#allocation4], %s239
        %s241 = sand.u32 %s140, 1
        %s242 = smul.addr %s241, 32
        %s243 = scalar_lea.vmem [#allocation5], %s242
        %s244 = smul.u32 2, %s22
        %s245 = smul.u32 2, %s22
        %v246 = vld [vmem:[%s217] sm:$0xff]
        %v247 = vld [vmem:[%s217 + $0x8] sm:$0xff]
        %s248 = scalar_lea.vmem %s217, 16 [#allocation2]
        %v249 = vld [vmem:[%s248] sm:$0xff]
        %v250 = vld [vmem:[%s248 + $0x8] sm:$0xff]
        %v251 = vlaneseq
        %v252 = vand.u32 %v251, 127
        %v253 = vadd.s32 %v252, 128
        %v254 = vadd.s32 %v252, 256
        %v255 = vadd.s32 %v252, 384
        %v256 = vand.u32 %v252, 15
        %v257 = vand.u32 %v253, 15
        %v258 = vand.u32 %v254, 15
        %v259 = vand.u32 %v255, 15
        %v260 = vand.u32 %v252, 255
        %v261 = vand.u32 %v253, 255
        %v262 = vand.u32 %v254, 255
        %v263 = vand.u32 %v255, 255
        %v264 = vshra.s32 %v260, 4
        %v265 = vshra.s32 %v261, 4
        %v266 = vshra.s32 %v262, 4
        %v267 = vshra.s32 %v263, 4
        %vm268 = vcmp.ge.s32.totalorder %v264, 1
        %vm269 = vcmp.ge.s32.totalorder %v265, 1
        %vm270 = vcmp.ge.s32.totalorder %v266, 1
        %vm271 = vcmp.ge.s32.totalorder %v267, 1
        %vm272 = vcmp.le.s32.totalorder %v264, 14
        %vm273 = vcmp.le.s32.totalorder %v265, 14
        %vm274 = vcmp.le.s32.totalorder %v266, 14
        %vm275 = vcmp.le.s32.totalorder %v267, 14
        %vm276 = vcmp.ge.s32.totalorder %v256, 1
        %vm277 = vcmp.ge.s32.totalorder %v257, 1
        %vm278 = vcmp.ge.s32.totalorder %v258, 1
        %vm279 = vcmp.ge.s32.totalorder %v259, 1
        %vm280 = vcmp.le.s32.totalorder %v256, 14
        %vm281 = vcmp.le.s32.totalorder %v257, 14
        %vm282 = vcmp.le.s32.totalorder %v258, 14
        %vm283 = vcmp.le.s32.totalorder %v259, 14
        %vm284 = vmand %vm268, %vm276
        %vm285 = vmand %vm269, %vm277
        %vm286 = vmand %vm270, %vm278
        %vm287 = vmand %vm271, %vm279
        %v288 = vsel %vm284, 1.0, 0.0
        %v289 = vsel %vm285, 1.0, 0.0
        %v290 = vsel %vm286, 1.0, 0.0
        %v291 = vsel %vm287, 1.0, 0.0
        %v292 = vsel %vm268, 1.0, 0.0
        %v293 = vsel %vm269, 1.0, 0.0
        %v294 = vsel %vm270, 1.0, 0.0
        %v295 = vsel %vm271, 1.0, 0.0
        %vm296 = vmand %vm268, %vm280
        %vm297 = vmand %vm269, %vm281
        %vm298 = vmand %vm270, %vm282
        %vm299 = vmand %vm271, %vm283
        %v300 = vsel %vm296, 1.0, 0.0
        %v301 = vsel %vm297, 1.0, 0.0
        %v302 = vsel %vm298, 1.0, 0.0
        %v303 = vsel %vm299, 1.0, 0.0
        %v304 = vsel %vm276, 1.0, 0.0
        %v305 = vsel %vm277, 1.0, 0.0
        %v306 = vsel %vm278, 1.0, 0.0
        %v307 = vsel %vm279, 1.0, 0.0
        %v308 = vsel %vm280, 1.0, 0.0
        %v309 = vsel %vm281, 1.0, 0.0
        %v310 = vsel %vm282, 1.0, 0.0
        %v311 = vsel %vm283, 1.0, 0.0
        %vm312 = vmand %vm272, %vm276
        %vm313 = vmand %vm273, %vm277
        %vm314 = vmand %vm274, %vm278
        %vm315 = vmand %vm275, %vm279
        %v316 = vsel %vm312, 1.0, 0.0
        %v317 = vsel %vm313, 1.0, 0.0
        %v318 = vsel %vm314, 1.0, 0.0
        %v319 = vsel %vm315, 1.0, 0.0
        %v320 = vsel %vm272, 1.0, 0.0
        %v321 = vsel %vm273, 1.0, 0.0
        %v322 = vsel %vm274, 1.0, 0.0
        %v323 = vsel %vm275, 1.0, 0.0
        %vm324 = vmand %vm272, %vm280
        %vm325 = vmand %vm273, %vm281
        %vm326 = vmand %vm274, %vm282
        %vm327 = vmand %vm275, %vm283
        %v328 = vsel %vm324, 1.0, 0.0
        %v329 = vsel %vm325, 1.0, 0.0
        %v330 = vsel %vm326, 1.0, 0.0
        %v331 = vsel %vm327, 1.0, 0.0
        %332 = vrot.lane.b32.xlu0 %v246, 17
        %v333 = vpop.permute.xlu0 %332
        %334 = vrot.lane.b32.xlu0 %v247, 17
        %v335 = vpop.permute.xlu0 %334
        %336 = vrot.lane.b32.xlu0 %v249, 17
        %v337 = vpop.permute.xlu0 %336
        %338 = vrot.lane.b32.xlu0 %v250, 17
        %v339 = vpop.permute.xlu0 %338
        %vm340 = vcmp.lt.s32.totalorder %v252, 17
        %v341 = vsel %vm340, %v337, %v339
        %v342 = vsel %vm340, %v335, %v337
        %v343 = vsel %vm340, %v333, %v335
        %v344 = vsel %vm340, %v339, %v333
        %v345 = vmul.f32 %v344, %v288
        %v346 = vmul.f32 %v343, %v289
        %v347 = vmul.f32 %v342, %v290
        %v348 = vmul.f32 %v341, %v291
        %349 = vrot.lane.b32.xlu0 %v246, 16
        %v350 = vpop.permute.xlu0 %349
        %351 = vrot.lane.b32.xlu0 %v247, 16
        %v352 = vpop.permute.xlu0 %351
        %353 = vrot.lane.b32.xlu0 %v249, 16
        %v354 = vpop.permute.xlu0 %353
        %355 = vrot.lane.b32.xlu0 %v250, 16
        %v356 = vpop.permute.xlu0 %355
        %vm357 = vcmp.lt.s32.totalorder %v252, 16
        %v358 = vsel %vm357, %v354, %v356
        %v359 = vsel %vm357, %v352, %v354
        %v360 = vsel %vm357, %v350, %v352
        %v361 = vsel %vm357, %v356, %v350
        %v362 = vmul.f32 %v361, %v292
        %v363 = vmul.f32 %v360, %v293
        %v364 = vmul.f32 %v359, %v294
        %v365 = vmul.f32 %v358, %v295
        %366 = vrot.lane.b32.xlu0 %v246, 15
        %v367 = vpop.permute.xlu0 %366
        %368 = vrot.lane.b32.xlu0 %v247, 15
        %v369 = vpop.permute.xlu0 %368
        %370 = vrot.lane.b32.xlu0 %v249, 15
        %v371 = vpop.permute.xlu0 %370
        %372 = vrot.lane.b32.xlu0 %v250, 15
        %v373 = vpop.permute.xlu0 %372
        %vm374 = vcmp.lt.s32.totalorder %v252, 15
        %v375 = vsel %vm374, %v371, %v373
        %v376 = vsel %vm374, %v369, %v371
        %v377 = vsel %vm374, %v367, %v369
        %v378 = vsel %vm374, %v373, %v367
        %v379 = vmul.f32 %v378, %v300
        %v380 = vmul.f32 %v377, %v301
        %v381 = vmul.f32 %v376, %v302
        %v382 = vmul.f32 %v375, %v303
        %383 = vrot.lane.b32.xlu0 %v246, 1
        %v384 = vpop.permute.xlu0 %383
        %385 = vrot.lane.b32.xlu0 %v247, 1
        %v386 = vpop.permute.xlu0 %385
        %387 = vrot.lane.b32.xlu0 %v249, 1
        %v388 = vpop.permute.xlu0 %387
        %389 = vrot.lane.b32.xlu0 %v250, 1
        %v390 = vpop.permute.xlu0 %389
        %vm391 = vcmp.lt.s32.totalorder %v252, 1
        %v392 = vsel %vm391, %v388, %v390
        %v393 = vsel %vm391, %v386, %v388
        %v394 = vsel %vm391, %v384, %v386
        %v395 = vsel %vm391, %v390, %v384
        %v396 = vmul.f32 %v395, %v304
        %v397 = vmul.f32 %v394, %v305
        %v398 = vmul.f32 %v393, %v306
        %v399 = vmul.f32 %v392, %v307
        %400 = vrot.lane.b32.xlu0 %v246, 127
        %v401 = vpop.permute.xlu0 %400
        %402 = vrot.lane.b32.xlu0 %v247, 127
        %v403 = vpop.permute.xlu0 %402
        %404 = vrot.lane.b32.xlu0 %v249, 127
        %v405 = vpop.permute.xlu0 %404
        %406 = vrot.lane.b32.xlu0 %v250, 127
        %v407 = vpop.permute.xlu0 %406
        %vm408 = vcmp.lt.s32.totalorder %v252, 127
        %v409 = vsel %vm408, %v405, %v407
        %v410 = vsel %vm408, %v403, %v405
        %v411 = vsel %vm408, %v401, %v403
        %v412 = vsel %vm408, %v407, %v401
        %v413 = vmul.f32 %v411, %v308
        %v414 = vmul.f32 %v410, %v309
        %v415 = vmul.f32 %v409, %v310
        %v416 = vmul.f32 %v412, %v311
        %417 = vrot.lane.b32.xlu0 %v246, 113
        %v418 = vpop.permute.xlu0 %417
        %419 = vrot.lane.b32.xlu0 %v247, 113
        %v420 = vpop.permute.xlu0 %419
        %421 = vrot.lane.b32.xlu0 %v249, 113
        %v422 = vpop.permute.xlu0 %421
        %423 = vrot.lane.b32.xlu0 %v250, 113
        %v424 = vpop.permute.xlu0 %423
        %vm425 = vcmp.lt.s32.totalorder %v252, 113
        %v426 = vsel %vm425, %v422, %v424
        %v427 = vsel %vm425, %v420, %v422
        %v428 = vsel %vm425, %v418, %v420
        %v429 = vsel %vm425, %v424, %v418
        %v430 = vmul.f32 %v428, %v316
        %v431 = vmul.f32 %v427, %v317
        %v432 = vmul.f32 %v426, %v318
        %v433 = vmul.f32 %v429, %v319
        %434 = vrot.lane.b32.xlu0 %v246, 112
        %v435 = vpop.permute.xlu0 %434
        %436 = vrot.lane.b32.xlu0 %v247, 112
        %v437 = vpop.permute.xlu0 %436
        %438 = vrot.lane.b32.xlu0 %v249, 112
        %v439 = vpop.permute.xlu0 %438
        %440 = vrot.lane.b32.xlu0 %v250, 112
        %v441 = vpop.permute.xlu0 %440
        %vm442 = vcmp.lt.s32.totalorder %v252, 112
        %v443 = vsel %vm442, %v439, %v441
        %v444 = vsel %vm442, %v437, %v439
        %v445 = vsel %vm442, %v435, %v437
        %v446 = vsel %vm442, %v441, %v435
        %v447 = vmul.f32 %v445, %v320
        %v448 = vmul.f32 %v444, %v321
        %v449 = vmul.f32 %v443, %v322
        %v450 = vmul.f32 %v446, %v323
        %451 = vrot.lane.b32.xlu0 %v246, 111
        %v452 = vpop.permute.xlu0 %451
        %453 = vrot.lane.b32.xlu0 %v247, 111
        %v454 = vpop.permute.xlu0 %453
        %455 = vrot.lane.b32.xlu0 %v249, 111
        %v456 = vpop.permute.xlu0 %455
        %457 = vrot.lane.b32.xlu0 %v250, 111
        %v458 = vpop.permute.xlu0 %457
        %vm459 = vcmp.lt.s32.totalorder %v252, 111
        %v460 = vsel %vm459, %v456, %v458
        %v461 = vsel %vm459, %v454, %v456
        %v462 = vsel %vm459, %v452, %v454
        %v463 = vsel %vm459, %v458, %v452
        %v464 = vmul.f32 %v462, %v328
        %v465 = vmul.f32 %v461, %v329
        %v466 = vmul.f32 %v460, %v330
        %v467 = vmul.f32 %v463, %v331
        %v468 = vld [vmem:[%s1] sm:$0xff]
        %v469 = vld [vmem:[%s2] sm:$0xff]
        %471 = vset.pattern.permute.xlu0 0
        %472 = vperm.xlu0 %471, %v469
        %v473 = vpop.permute.xlu0 %472
        %vm475 = vcmask 588800
        %v477 = vsel %vm475, %v468, 0
        %479 = vmatprep.subr.mxu0 0.0
        %480 = vmatpush1.msra.mxu0 0.0
        %481 = vmatprep.subr.mxu0 0.0
        %482 = vmatpush1.msra.mxu0 0.0
        %483 = vmatprep.subr.mxu0 0.0
        %484 = vmatpush1.msra.mxu0 0.0
        %485 = vmatprep.subr.mxu0 0.0
        %486 = vmatpush1.msra.mxu0 0.0
        %487 = vmatprep.subr.mxu0 0.0
        %488 = vmatpush1.msra.mxu0 0.0
        %489 = vmatprep.subr.mxu0 0.0
        %490 = vmatpush1.msra.mxu0 0.0
        %491 = vmatprep.subr.mxu0 0.0
        %492 = vmatpush1.msra.mxu0 0.0
        %493 = vmatprep.subr.mxu0 %v465
        %494 = vmatpush1.msra.mxu0 %v464
        %495 = vmatprep.subr.mxu0 %v448
        %496 = vmatpush1.msra.mxu0 %v447
        %497 = vmatprep.subr.mxu0 %v431
        %498 = vmatpush1.msra.mxu0 %v430
        %499 = vmatprep.subr.mxu0 %v414
        %500 = vmatpush1.msra.mxu0 %v413
        %501 = vmatprep.subr.mxu0 %v247
        %502 = vmatpush1.msra.mxu0 %v246
        %503 = vmatprep.subr.mxu0 %v397
        %504 = vmatpush1.msra.mxu0 %v396
        %505 = vmatprep.subr.mxu0 %v380
        %506 = vmatpush1.msra.mxu0 %v379
        %507 = vmatprep.subr.mxu0 %v363
        %508 = vmatpush1.msra.mxu0 %v362
        %509 = vmatprep.subr.mxu0 %v346
        %510 = vmatpush1.msra.mxu0 %v345
        %511 = vmatprep.subr.mxu0 0.0
        %512 = vmatpush2.msra.mxu0 0.0
        %513 = vmatprep.subr.mxu0 0.0
        %514 = vmatpush2.msra.mxu0 0.0
        %515 = vmatprep.subr.mxu0 0.0
        %516 = vmatpush2.msra.mxu0 0.0
        %517 = vmatprep.subr.mxu0 0.0
        %518 = vmatpush2.msra.mxu0 0.0
        %519 = vmatprep.subr.mxu0 0.0
        %520 = vmatpush2.msra.mxu0 0.0
        %521 = vmatprep.subr.mxu0 0.0
        %522 = vmatpush2.msra.mxu0 0.0
        %523 = vmatprep.subr.mxu0 0.0
        %524 = vmatpush2.msra.mxu0 0.0
        %525 = vmatprep.subr.mxu0 0.0
        %526 = vmatpush2.msra.mxu0 0.0
        %527 = vmatprep.subr.mxu0 0.0
        %528 = vmatpush2.msra.mxu0 0.0
        %529 = vmatprep.subr.mxu0 0.0
        %530 = vmatpush2.msra.mxu0 0.0
        %531 = vmatprep.subr.mxu0 0.0
        %532 = vmatpush2.msra.mxu0 0.0
        %533 = vmatprep.subr.mxu0 0.0
        %534 = vmatpush2.msra.mxu0 0.0
        %535 = vmatprep.subr.mxu0 0.0
        %536 = vmatpush2.msra.mxu0 0.0
        %537 = vmatprep.subr.mxu0 0.0
        %538 = vmatpush2.msra.mxu0 0.0
        %539 = vmatprep.subr.mxu0 0.0
        %540 = vmatpush2.msra.mxu0 0.0
        %541 = vmatprep.subr.mxu0 0.0
        %542 = vmatpush2.msra.mxu0 0.0
        %543 = vmatprep.mubr.f32.mxu0 0.0
        %544 = vmatmul.mubr.f32.gmra.mxu0 %v477
        %v545 = vpop.f32.mrf.mxu0
        %v546 = vadd.f32 %v473, %v545
        %v547 = vpop.f32.mrf.mxu0
        %v548 = vadd.f32 %v473, %v547
        %549 = vdwg.mxu0
        %550 = vmatprep.subr.mxu0 0.0
        %551 = vmatpush1.msra.mxu0 0.0
        %552 = vmatprep.subr.mxu0 0.0
        %553 = vmatpush1.msra.mxu0 0.0
        %554 = vmatprep.subr.mxu0 0.0
        %555 = vmatpush1.msra.mxu0 0.0
        %556 = vmatprep.subr.mxu0 0.0
        %557 = vmatpush1.msra.mxu0 0.0
        %558 = vmatprep.subr.mxu0 0.0
        %559 = vmatpush1.msra.mxu0 0.0
        %560 = vmatprep.subr.mxu0 0.0
        %561 = vmatpush1.msra.mxu0 0.0
        %562 = vmatprep.subr.mxu0 0.0
        %563 = vmatpush1.msra.mxu0 0.0
        %564 = vmatprep.subr.mxu0 %v467
        %565 = vmatpush1.msra.mxu0 %v466
        %566 = vmatprep.subr.mxu0 %v450
        %567 = vmatpush1.msra.mxu0 %v449
        %568 = vmatprep.subr.mxu0 %v433
        %569 = vmatpush1.msra.mxu0 %v432
        %570 = vmatprep.subr.mxu0 %v416
        %571 = vmatpush1.msra.mxu0 %v415
        %572 = vmatprep.subr.mxu0 %v250
        %573 = vmatpush1.msra.mxu0 %v249
        %574 = vmatprep.subr.mxu0 %v399
        %575 = vmatpush1.msra.mxu0 %v398
        %576 = vmatprep.subr.mxu0 %v382
        %577 = vmatpush1.msra.mxu0 %v381
        %578 = vmatprep.subr.mxu0 %v365
        %579 = vmatpush1.msra.mxu0 %v364
        %580 = vmatprep.subr.mxu0 %v348
        %581 = vmatpush1.msra.mxu0 %v347
        %582 = vmatprep.subr.mxu0 0.0
        %583 = vmatpush2.msra.mxu0 0.0
        %584 = vmatprep.subr.mxu0 0.0
        %585 = vmatpush2.msra.mxu0 0.0
        %586 = vmatprep.subr.mxu0 0.0
        %587 = vmatpush2.msra.mxu0 0.0
        %588 = vmatprep.subr.mxu0 0.0
        %589 = vmatpush2.msra.mxu0 0.0
        %590 = vmatprep.subr.mxu0 0.0
        %591 = vmatpush2.msra.mxu0 0.0
        %592 = vmatprep.subr.mxu0 0.0
        %593 = vmatpush2.msra.mxu0 0.0
        %594 = vmatprep.subr.mxu0 0.0
        %595 = vmatpush2.msra.mxu0 0.0
        %596 = vmatprep.subr.mxu0 0.0
        %597 = vmatpush2.msra.mxu0 0.0
        %598 = vmatprep.subr.mxu0 0.0
        %599 = vmatpush2.msra.mxu0 0.0
        %600 = vmatprep.subr.mxu0 0.0
        %601 = vmatpush2.msra.mxu0 0.0
        %602 = vmatprep.subr.mxu0 0.0
        %603 = vmatpush2.msra.mxu0 0.0
        %604 = vmatprep.subr.mxu0 0.0
        %605 = vmatpush2.msra.mxu0 0.0
        %606 = vmatprep.subr.mxu0 0.0
        %607 = vmatpush2.msra.mxu0 0.0
        %608 = vmatprep.subr.mxu0 0.0
        %609 = vmatpush2.msra.mxu0 0.0
        %610 = vmatprep.subr.mxu0 0.0
        %611 = vmatpush2.msra.mxu0 0.0
        %612 = vmatprep.subr.mxu0 0.0
        %613 = vmatpush2.msra.mxu0 0.0
        %614 = vmatprep.mubr.f32.mxu0 0.0
        %615 = vmatmul.mubr.f32.gmra.mxu0 %v477
        %v616 = vpop.f32.mrf.mxu0
        %v617 = vadd.f32 %v473, %v616
        %v618 = vpop.f32.mrf.mxu0
        %v619 = vadd.f32 %v473, %v618
        %620 = vdwg.mxu0
        %v621 = vmax.f32 %v546, 0.0
        %v622 = vmax.f32 %v548, 0.0
        %v623 = vmax.f32 %v617, 0.0
        %v624 = vmax.f32 %v619, 0.0
        %625 = vrot.lane.b32.xlu0 %v621, 17
        %v626 = vpop.permute.xlu0 %625
        %627 = vrot.lane.b32.xlu0 %v622, 17
        %v628 = vpop.permute.xlu0 %627
        %629 = vrot.lane.b32.xlu0 %v623, 17
        %v630 = vpop.permute.xlu0 %629
        %631 = vrot.lane.b32.xlu0 %v624, 17
        %v632 = vpop.permute.xlu0 %631
        %v633 = vsel %vm340, %v630, %v632
        %v634 = vsel %vm340, %v628, %v630
        %v635 = vsel %vm340, %v626, %v628
        %v636 = vsel %vm340, %v632, %v626
        %v637 = vmul.f32 %v636, %v288
        %v638 = vmul.f32 %v635, %v289
        %v639 = vmul.f32 %v634, %v290
        %v640 = vmul.f32 %v633, %v291
        %641 = vrot.lane.b32.xlu0 %v621, 16
        %v642 = vpop.permute.xlu0 %641
        %643 = vrot.lane.b32.xlu0 %v622, 16
        %v644 = vpop.permute.xlu0 %643
        %645 = vrot.lane.b32.xlu0 %v623, 16
        %v646 = vpop.permute.xlu0 %645
        %647 = vrot.lane.b32.xlu0 %v624, 16
        %v648 = vpop.permute.xlu0 %647
        %v649 = vsel %vm357, %v646, %v648
        %v650 = vsel %vm357, %v644, %v646
        %v651 = vsel %vm357, %v642, %v644
        %v652 = vsel %vm357, %v648, %v642
        %v653 = vmul.f32 %v652, %v292
        %v654 = vmul.f32 %v651, %v293
        %v655 = vmul.f32 %v650, %v294
        %v656 = vmul.f32 %v649, %v295
        %657 = vrot.lane.b32.xlu0 %v621, 15
        %v658 = vpop.permute.xlu0 %657
        %659 = vrot.lane.b32.xlu0 %v622, 15
        %v660 = vpop.permute.xlu0 %659
        %661 = vrot.lane.b32.xlu0 %v623, 15
        %v662 = vpop.permute.xlu0 %661
        %663 = vrot.lane.b32.xlu0 %v624, 15
        %v664 = vpop.permute.xlu0 %663
        %v665 = vsel %vm374, %v662, %v664
        %v666 = vsel %vm374, %v660, %v662
        %v667 = vsel %vm374, %v658, %v660
        %v668 = vsel %vm374, %v664, %v658
        %v669 = vmul.f32 %v668, %v300
        %v670 = vmul.f32 %v667, %v301
        %v671 = vmul.f32 %v666, %v302
        %v672 = vmul.f32 %v665, %v303
        %673 = vrot.lane.b32.xlu0 %v621, 1
        %v674 = vpop.permute.xlu0 %673
        %675 = vrot.lane.b32.xlu0 %v622, 1
        %v676 = vpop.permute.xlu0 %675
        %677 = vrot.lane.b32.xlu0 %v623, 1
        %v678 = vpop.permute.xlu0 %677
        %679 = vrot.lane.b32.xlu0 %v624, 1
        %v680 = vpop.permute.xlu0 %679
        %v681 = vsel %vm391, %v678, %v680
        %v682 = vsel %vm391, %v676, %v678
        %v683 = vsel %vm391, %v674, %v676
        %v684 = vsel %vm391, %v680, %v674
        %v685 = vmul.f32 %v684, %v304
        %v686 = vmul.f32 %v683, %v305
        %v687 = vmul.f32 %v682, %v306
        %v688 = vmul.f32 %v681, %v307
        %689 = vrot.lane.b32.xlu0 %v621, 127
        %v690 = vpop.permute.xlu0 %689
        %691 = vrot.lane.b32.xlu0 %v622, 127
        %v692 = vpop.permute.xlu0 %691
        %693 = vrot.lane.b32.xlu0 %v623, 127
        %v694 = vpop.permute.xlu0 %693
        %695 = vrot.lane.b32.xlu0 %v624, 127
        %v696 = vpop.permute.xlu0 %695
        %v697 = vsel %vm408, %v694, %v696
        %v698 = vsel %vm408, %v692, %v694
        %v699 = vsel %vm408, %v690, %v692
        %v700 = vsel %vm408, %v696, %v690
        %v701 = vmul.f32 %v699, %v308
        %v702 = vmul.f32 %v698, %v309
        %v703 = vmul.f32 %v697, %v310
        %v704 = vmul.f32 %v700, %v311
        %705 = vrot.lane.b32.xlu0 %v621, 113
        %v706 = vpop.permute.xlu0 %705
        %707 = vrot.lane.b32.xlu0 %v622, 113
        %v708 = vpop.permute.xlu0 %707
        %709 = vrot.lane.b32.xlu0 %v623, 113
        %v710 = vpop.permute.xlu0 %709
        %711 = vrot.lane.b32.xlu0 %v624, 113
        %v712 = vpop.permute.xlu0 %711
        %v713 = vsel %vm425, %v710, %v712
        %v714 = vsel %vm425, %v708, %v710
        %v715 = vsel %vm425, %v706, %v708
        %v716 = vsel %vm425, %v712, %v706
        %v717 = vmul.f32 %v715, %v316
        %v718 = vmul.f32 %v714, %v317
        %v719 = vmul.f32 %v713, %v318
        %v720 = vmul.f32 %v716, %v319
        %721 = vrot.lane.b32.xlu0 %v621, 112
        %v722 = vpop.permute.xlu0 %721
        %723 = vrot.lane.b32.xlu0 %v622, 112
        %v724 = vpop.permute.xlu0 %723
        %725 = vrot.lane.b32.xlu0 %v623, 112
        %v726 = vpop.permute.xlu0 %725
        %727 = vrot.lane.b32.xlu0 %v624, 112
        %v728 = vpop.permute.xlu0 %727
        %v729 = vsel %vm442, %v726, %v728
        %v730 = vsel %vm442, %v724, %v726
        %v731 = vsel %vm442, %v722, %v724
        %v732 = vsel %vm442, %v728, %v722
        %v733 = vmul.f32 %v731, %v320
        %v734 = vmul.f32 %v730, %v321
        %v735 = vmul.f32 %v729, %v322
        %v736 = vmul.f32 %v732, %v323
        %737 = vrot.lane.b32.xlu0 %v621, 111
        %v738 = vpop.permute.xlu0 %737
        %739 = vrot.lane.b32.xlu0 %v622, 111
        %v740 = vpop.permute.xlu0 %739
        %741 = vrot.lane.b32.xlu0 %v623, 111
        %v742 = vpop.permute.xlu0 %741
        %743 = vrot.lane.b32.xlu0 %v624, 111
        %v744 = vpop.permute.xlu0 %743
        %v745 = vsel %vm459, %v742, %v744
        %v746 = vsel %vm459, %v740, %v742
        %v747 = vsel %vm459, %v738, %v740
        %v748 = vsel %vm459, %v744, %v738
        %v749 = vmul.f32 %v747, %v328
        %v750 = vmul.f32 %v746, %v329
        %v751 = vmul.f32 %v745, %v330
        %v752 = vmul.f32 %v748, %v331
        %v753 = vld [vmem:[%s3] sm:$0xff]
        %v754 = vld [vmem:[%s4] sm:$0xff]
        %756 = vset.pattern.permute.xlu0 0
        %757 = vperm.xlu0 %756, %v754
        %v758 = vpop.permute.xlu0 %757
        %v761 = vsel %vm475, %v753, 0
        %763 = vmatprep.subr.mxu0 0.0
        %764 = vmatpush1.msra.mxu0 0.0
        %765 = vmatprep.subr.mxu0 0.0
        %766 = vmatpush1.msra.mxu0 0.0
        %767 = vmatprep.subr.mxu0 0.0
        %768 = vmatpush1.msra.mxu0 0.0
        %769 = vmatprep.subr.mxu0 0.0
        %770 = vmatpush1.msra.mxu0 0.0
        %771 = vmatprep.subr.mxu0 0.0
        %772 = vmatpush1.msra.mxu0 0.0
        %773 = vmatprep.subr.mxu0 0.0
        %774 = vmatpush1.msra.mxu0 0.0
        %775 = vmatprep.subr.mxu0 0.0
        %776 = vmatpush1.msra.mxu0 0.0
        %777 = vmatprep.subr.mxu0 %v750
        %778 = vmatpush1.msra.mxu0 %v749
        %779 = vmatprep.subr.mxu0 %v734
        %780 = vmatpush1.msra.mxu0 %v733
        %781 = vmatprep.subr.mxu0 %v718
        %782 = vmatpush1.msra.mxu0 %v717
        %783 = vmatprep.subr.mxu0 %v702
        %784 = vmatpush1.msra.mxu0 %v701
        %785 = vmatprep.subr.mxu0 %v622
        %786 = vmatpush1.msra.mxu0 %v621
        %787 = vmatprep.subr.mxu0 %v686
        %788 = vmatpush1.msra.mxu0 %v685
        %789 = vmatprep.subr.mxu0 %v670
        %790 = vmatpush1.msra.mxu0 %v669
        %791 = vmatprep.subr.mxu0 %v654
        %792 = vmatpush1.msra.mxu0 %v653
        %793 = vmatprep.subr.mxu0 %v638
        %794 = vmatpush1.msra.mxu0 %v637
        %795 = vmatprep.subr.mxu0 0.0
        %796 = vmatpush2.msra.mxu0 0.0
        %797 = vmatprep.subr.mxu0 0.0
        %798 = vmatpush2.msra.mxu0 0.0
        %799 = vmatprep.subr.mxu0 0.0
        %800 = vmatpush2.msra.mxu0 0.0
        %801 = vmatprep.subr.mxu0 0.0
        %802 = vmatpush2.msra.mxu0 0.0
        %803 = vmatprep.subr.mxu0 0.0
        %804 = vmatpush2.msra.mxu0 0.0
        %805 = vmatprep.subr.mxu0 0.0
        %806 = vmatpush2.msra.mxu0 0.0
        %807 = vmatprep.subr.mxu0 0.0
        %808 = vmatpush2.msra.mxu0 0.0
        %809 = vmatprep.subr.mxu0 0.0
        %810 = vmatpush2.msra.mxu0 0.0
        %811 = vmatprep.subr.mxu0 0.0
        %812 = vmatpush2.msra.mxu0 0.0
        %813 = vmatprep.subr.mxu0 0.0
        %814 = vmatpush2.msra.mxu0 0.0
        %815 = vmatprep.subr.mxu0 0.0
        %816 = vmatpush2.msra.mxu0 0.0
        %817 = vmatprep.subr.mxu0 0.0
        %818 = vmatpush2.msra.mxu0 0.0
        %819 = vmatprep.subr.mxu0 0.0
        %820 = vmatpush2.msra.mxu0 0.0
        %821 = vmatprep.subr.mxu0 0.0
        %822 = vmatpush2.msra.mxu0 0.0
        %823 = vmatprep.subr.mxu0 0.0
        %824 = vmatpush2.msra.mxu0 0.0
        %825 = vmatprep.subr.mxu0 0.0
        %826 = vmatpush2.msra.mxu0 0.0
        %827 = vmatprep.mubr.f32.mxu0 0.0
        %828 = vmatmul.mubr.f32.gmra.mxu0 %v761
        %v829 = vpop.f32.mrf.mxu0
        %v830 = vadd.f32 %v758, %v829
        %v831 = vpop.f32.mrf.mxu0
        %v832 = vadd.f32 %v758, %v831
        %833 = vdwg.mxu0
        %834 = vmatprep.subr.mxu0 0.0
        %835 = vmatpush1.msra.mxu0 0.0
        %836 = vmatprep.subr.mxu0 0.0
        %837 = vmatpush1.msra.mxu0 0.0
        %838 = vmatprep.subr.mxu0 0.0
        %839 = vmatpush1.msra.mxu0 0.0
        %840 = vmatprep.subr.mxu0 0.0
        %841 = vmatpush1.msra.mxu0 0.0
        %842 = vmatprep.subr.mxu0 0.0
        %843 = vmatpush1.msra.mxu0 0.0
        %844 = vmatprep.subr.mxu0 0.0
        %845 = vmatpush1.msra.mxu0 0.0
        %846 = vmatprep.subr.mxu0 0.0
        %847 = vmatpush1.msra.mxu0 0.0
        %848 = vmatprep.subr.mxu0 %v752
        %849 = vmatpush1.msra.mxu0 %v751
        %850 = vmatprep.subr.mxu0 %v736
        %851 = vmatpush1.msra.mxu0 %v735
        %852 = vmatprep.subr.mxu0 %v720
        %853 = vmatpush1.msra.mxu0 %v719
        %854 = vmatprep.subr.mxu0 %v704
        %855 = vmatpush1.msra.mxu0 %v703
        %856 = vmatprep.subr.mxu0 %v624
        %857 = vmatpush1.msra.mxu0 %v623
        %858 = vmatprep.subr.mxu0 %v688
        %859 = vmatpush1.msra.mxu0 %v687
        %860 = vmatprep.subr.mxu0 %v672
        %861 = vmatpush1.msra.mxu0 %v671
        %862 = vmatprep.subr.mxu0 %v656
        %863 = vmatpush1.msra.mxu0 %v655
        %864 = vmatprep.subr.mxu0 %v640
        %865 = vmatpush1.msra.mxu0 %v639
        %866 = vmatprep.subr.mxu0 0.0
        %867 = vmatpush2.msra.mxu0 0.0
        %868 = vmatprep.subr.mxu0 0.0
        %869 = vmatpush2.msra.mxu0 0.0
        %870 = vmatprep.subr.mxu0 0.0
        %871 = vmatpush2.msra.mxu0 0.0
        %872 = vmatprep.subr.mxu0 0.0
        %873 = vmatpush2.msra.mxu0 0.0
        %874 = vmatprep.subr.mxu0 0.0
        %875 = vmatpush2.msra.mxu0 0.0
        %876 = vmatprep.subr.mxu0 0.0
        %877 = vmatpush2.msra.mxu0 0.0
        %878 = vmatprep.subr.mxu0 0.0
        %879 = vmatpush2.msra.mxu0 0.0
        %880 = vmatprep.subr.mxu0 0.0
        %881 = vmatpush2.msra.mxu0 0.0
        %882 = vmatprep.subr.mxu0 0.0
        %883 = vmatpush2.msra.mxu0 0.0
        %884 = vmatprep.subr.mxu0 0.0
        %885 = vmatpush2.msra.mxu0 0.0
        %886 = vmatprep.subr.mxu0 0.0
        %887 = vmatpush2.msra.mxu0 0.0
        %888 = vmatprep.subr.mxu0 0.0
        %889 = vmatpush2.msra.mxu0 0.0
        %890 = vmatprep.subr.mxu0 0.0
        %891 = vmatpush2.msra.mxu0 0.0
        %892 = vmatprep.subr.mxu0 0.0
        %893 = vmatpush2.msra.mxu0 0.0
        %894 = vmatprep.subr.mxu0 0.0
        %895 = vmatpush2.msra.mxu0 0.0
        %896 = vmatprep.subr.mxu0 0.0
        %897 = vmatpush2.msra.mxu0 0.0
        %898 = vmatprep.mubr.f32.mxu0 0.0
        %899 = vmatmul.mubr.f32.gmra.mxu0 %v761
        %v900 = vpop.f32.mrf.mxu0
        %v901 = vadd.f32 %v758, %v900
        %v902 = vpop.f32.mrf.mxu0
        %v903 = vadd.f32 %v758, %v902
        %904 = vdwg.mxu0
        %v905 = vadd.f32 %v830, %v246
        %v906 = vadd.f32 %v832, %v247
        %v907 = vadd.f32 %v901, %v249
        %v908 = vadd.f32 %v903, %v250
        %v909 = vmax.f32 %v905, 0.0
        %v910 = vmax.f32 %v906, 0.0
        %v911 = vmax.f32 %v907, 0.0
        %v912 = vmax.f32 %v908, 0.0
        %913 = vst [vmem:[%s243] sm:$0xff] %v909
        %914 = vst [vmem:[%s243 + $0x8] sm:$0xff] %v910
        %s915 = scalar_lea.vmem %s243, 16 [#allocation5]
        %916 = vst [vmem:[%s915] sm:$0xff] %v911
        %917 = vst [vmem:[%s915 + $0x8] sm:$0xff] %v912
        %s918 = sand.u32 %s140, 1
        %s919 = scalar_lea.sflag [#allocation4], %s918
        %s920 = sand.u32 %s140, 1
        %s921 = smul.addr %s920, 32
        %s922 = scalar_lea.vmem [#allocation5], %s921
        // Predicated region
        $region45: #{tpu_custom_call.1} parent=39 // pred_check
          %p923 = pneg %p150
        $region46: #{tpu_custom_call.1} parent=39 // pred_check_branch
          %925 = sbr.rel (%p923) target = $region48
        $region47: #{tpu_custom_call.1} parent=39 // pred_region
          %s926 = smul.u32 2, %s22
          %s928 = ssub.s32 512, 512
          %929 = vsyncadd %s919, %s928
          %s930 = smul.addr %s926, 2
          %s931 = smul.addr %s930, 128
          %s932 = scalar_lea.hbm %s5, %s931
          %s933 = sshll.u32 %s922, 4
          %s934 = int_to_ptr.vmem [resolvable:$true] %s933
          %939 = dma.vmem_to_hbm [thread:$0]  %s934, 512, %s932, %s919, 256, 256, 16
        $region48: #{tpu_custom_call.1} parent=39 // pred_fallthru
          _
      $region40: #{tpu_custom_call.1} parent=5 // pred_fallthru
        _
      %p940 = scmp.le.s32.totalorder 2, %s17
      // Predicated region
      $region49: #{tpu_custom_call.1} parent=5 // pred_check
        %p941 = pneg %p940
      $region50: #{tpu_custom_call.1} parent=5 // pred_check_branch
        %943 = sbr.rel (%p941) target = $region52
      $region51: #{tpu_custom_call.1} parent=5 // pred_region
        %s944 = ssub.s32 %s17, 2
        // Predicated region
        $region53: #{tpu_custom_call.1} parent=51 // pred_check
          %p945 = pneg %p156
        $region54: #{tpu_custom_call.1} parent=51 // pred_check_branch
          %947 = sbr.rel (%p945) target = $region56
        $region55: #{tpu_custom_call.1} parent=51 // pred_region
          %s948 = sand.u32 %s141, 1
          %s949 = scalar_lea.sflag [#allocation4], %s948
          %s950 = sand.u32 %s141, 1
          %s951 = smul.addr %s950, 32
          %s952 = scalar_lea.vmem [#allocation5], %s951
          %953 = dma.done %s949, 512
        $region56: #{tpu_custom_call.1} parent=51 // pred_fallthru
          _
      $region52: #{tpu_custom_call.1} parent=5 // pred_fallthru
        _
    $region6: #{tpu_custom_call.1} parent=1 // loop_footer
      %s21 = sadd.s32 1, %s17
    $region7: #{tpu_custom_call.1} parent=1 // loop_footer_branch
      %16 = sbr.rel target = $region3
    $region8: #{tpu_custom_call.1} parent=1 // loop_exit
      _
    %954 = vsyncpa [#allocation3], 1
    %s955 = scalar_lea.sflag [#allocation3], 1
    %956 = vsyncpa %s955, 1
    %957 = vsyncpa [#allocation4], 1
    %s958 = scalar_lea.sflag [#allocation4], 1
    %959 = vsyncpa %s958, 1

// kernel: tpu_custom_call.1
$region0: #{tpu_custom_call.1}
  #allocation0 [shape = 'u32[]', space=smem, size = 0x4, offset = 0x4, fixed_abs, tag = 'smem constant byte address 0x4 - core index']
  #allocation1 [shape = 'u32[144,128]{1,0:T(1,128)}', space=vmem, size = 0x12000, scoped, tag = 'internal scratch']
  %s0 = inlined_call_operand.hbm [shape: f32[4,8,256], index: 0, kind: input, shape index: {}]
  %s1 = inlined_call_operand.vmem [shape: f32[8,72], index: 1, kind: input, shape index: {}]
  %s2 = inlined_call_operand.vmem [shape: f32[8,1], index: 2, kind: input, shape index: {}]
  %s3 = inlined_call_operand.vmem [shape: f32[8,72], index: 3, kind: input, shape index: {}]
  %s4 = inlined_call_operand.vmem [shape: f32[8,1], index: 4, kind: input, shape index: {}]
  %s5 = inlined_call_operand.hbm [shape: f32[4,8,256], index: 5, kind: output, shape index: {}]
  %s6 = sld [smem:[#allocation0]]
  $region57: #{tpu_custom_call.1} parent=0
    _
  %s8 = ssub.s32 1, %s6
  %s9 = scalar_select 0, %s8, %s6
  $region1: #{tpu_custom_call.1} parent=0
    #allocation2 [shape = 'u8[32768]{0}', space=vmem, size = 0x8000, scoped, tag = 'input window, operand 0']
    #allocation3 [shape = 's32[2]{0}', space=sflag, size = 0x8, scoped, tag = 'scoped memory for tpu_custom_call.1']
    #allocation4 [shape = 's32[2]{0}', space=sflag, size = 0x8, scoped, tag = 'scoped memory for tpu_custom_call.1']
    #allocation5 [shape = 'u8[32768]{0}', space=vmem, size = 0x8000, scoped, tag = 'output window, operand 0']
    %10 = vsyncpa [#allocation3], 0
    %s11 = scalar_lea.sflag [#allocation3], 1
    %12 = vsyncpa %s11, 0
    %13 = vsyncpa [#allocation4], 0
    %s14 = scalar_lea.sflag [#allocation4], 1
    %15 = vsyncpa %s14, 0
    loop: start=0, step=1, limit=4
    $region2: #{tpu_custom_call.1} parent=1 // loop_pre_header
      _
    $region3: #{tpu_custom_call.1} parent=1 // loop_header
      %s17 = sphi 0, %s21
      %p18 = scmp.ge.s32.totalorder %s17, 4
      %s27 = sphi 0, %s29
      %s30 = sphi 0, %s27
      %s31 = sphi 0, %s30
      %s47 = sphi 0, %s31
      %s51 = sphi 0, %s51
      %s53 = sphi 0, %s51
      %s54 = sphi 0, %s53
      %s68 = sphi 0, %s54
      %s72 = sphi 0, %s72
      %s74 = sphi 0, %s72
      %s75 = sphi 0, %s74
      %s89 = sphi 0, %s75
      %s93 = sphi 0, %s93
      %s95 = sphi 0, %s93
      %s96 = sphi 0, %s95
      %s110 = sphi 0, %s96
      %s114 = sphi 0, %s114
      %s116 = sphi 0, %s114
      %s117 = sphi 0, %s116
      %s131 = sphi 0, %s117
      %s137 = sphi 0, %s139
      %s140 = sphi 0, %s137
      %s141 = sphi 0, %s140
      %s157 = sphi 0, %s141
    $region4: #{tpu_custom_call.1} parent=1 // loop_header_branch
      %20 = sbr.rel (%p18) target = $region8
    $region5: #{tpu_custom_call.1} parent=1 // loop_body
      %s22 = ssub.s32 %s17, 1
      %s23 = ssub.s32 %s17, 2
      %s24 = sadd.s32 %s17, 1
      %s25 = ssub.s32 %s17, %s24
      %p26 = scmp.eq.s32.totalorder %s25, 0
      %s28 = sadd.s32 %s27, 1
      %s29 = scalar_select %p26, %s27, %s28
      %p32 = pneg %p26
      %p33 = scmp.eq.s32.totalorder %s17, 1
      %p34 = por %p32, %p33
      %p35 = scmp.ne.s32.totalorder %s27, %s30
      %p36 = scmp.eq.s32.totalorder %s17, 0
      %p37 = por %p35, %p36
      %p38 = scmp.ne.s32.totalorder %s27, %s30
      %p39 = scmp.eq.s32.totalorder %s22, 1
      %p40 = por %p38, %p39
      %p41 = scmp.ne.s32.totalorder %s30, %s31
      %p42 = scmp.eq.s32.totalorder %s22, 0
      %p43 = por %p41, %p42
      %p44 = scmp.ne.s32.totalorder %s30, %s31
      %p45 = scmp.eq.s32.totalorder %s23, 1
      %p46 = por %p44, %p45
      %p48 = scmp.ne.s32.totalorder %s31, %s47
      %p49 = scmp.eq.s32.totalorder %s23, 0
      %p50 = por %p48, %p49
      %s52 = sadd.s32 %s51, 1
      %p55 = scmp.eq.s32.totalorder %s17, 1
      %p56 = scmp.ne.s32.totalorder %s51, %s53
      %p57 = scmp.eq.s32.totalorder %s17, 0
      %p58 = por %p56, %p57
      %p59 = scmp.ne.s32.totalorder %s51, %s53
      %p60 = scmp.eq.s32.totalorder %s22, 1
      %p61 = por %p59, %p60
      %p62 = scmp.ne.s32.totalorder %s53, %s54
      %p63 = scmp.eq.s32.totalorder %s22, 0
      %p64 = por %p62, %p63
      %p65 = scmp.ne.s32.totalorder %s53, %s54
      %p66 = scmp.eq.s32.totalorder %s23, 1
      %p67 = por %p65, %p66
      %p69 = scmp.ne.s32.totalorder %s54, %s68
      %p70 = scmp.eq.s32.totalorder %s23, 0
      %p71 = por %p69, %p70
      %s73 = sadd.s32 %s72, 1
      %p76 = scmp.eq.s32.totalorder %s17, 1
      %p77 = scmp.ne.s32.totalorder %s72, %s74
      %p78 = scmp.eq.s32.totalorder %s17, 0
      %p79 = por %p77, %p78
      %p80 = scmp.ne.s32.totalorder %s72, %s74
      %p81 = scmp.eq.s32.totalorder %s22, 1
      %p82 = por %p80, %p81
      %p83 = scmp.ne.s32.totalorder %s74, %s75
      %p84 = scmp.eq.s32.totalorder %s22, 0
      %p85 = por %p83, %p84
      %p86 = scmp.ne.s32.totalorder %s74, %s75
      %p87 = scmp.eq.s32.totalorder %s23, 1
      %p88 = por %p86, %p87
      %p90 = scmp.ne.s32.totalorder %s75, %s89
      %p91 = scmp.eq.s32.totalorder %s23, 0
      %p92 = por %p90, %p91
      %s94 = sadd.s32 %s93, 1
      %p97 = scmp.eq.s32.totalorder %s17, 1
      %p98 = scmp.ne.s32.totalorder %s93, %s95
      %p99 = scmp.eq.s32.totalorder %s17, 0
      %p100 = por %p98, %p99
      %p101 = scmp.ne.s32.totalorder %s93, %s95
      %p102 = scmp.eq.s32.totalorder %s22, 1
      %p103 = por %p101, %p102
      %p104 = scmp.ne.s32.totalorder %s95, %s96
      %p105 = scmp.eq.s32.totalorder %s22, 0
      %p106 = por %p104, %p105
      %p107 = scmp.ne.s32.totalorder %s95, %s96
      %p108 = scmp.eq.s32.totalorder %s23, 1
      %p109 = por %p107, %p108
      %p111 = scmp.ne.s32.totalorder %s96, %s110
      %p112 = scmp.eq.s32.totalorder %s23, 0
      %p113 = por %p111, %p112
      %s115 = sadd.s32 %s114, 1
      %p118 = scmp.eq.s32.totalorder %s17, 1
      %p119 = scmp.ne.s32.totalorder %s114, %s116
      %p120 = scmp.eq.s32.totalorder %s17, 0
      %p121 = por %p119, %p120
      %p122 = scmp.ne.s32.totalorder %s114, %s116
      %p123 = scmp.eq.s32.totalorder %s22, 1
      %p124 = por %p122, %p123
      %p125 = scmp.ne.s32.totalorder %s116, %s117
      %p126 = scmp.eq.s32.totalorder %s22, 0
      %p127 = por %p125, %p126
      %p128 = scmp.ne.s32.totalorder %s116, %s117
      %p129 = scmp.eq.s32.totalorder %s23, 1
      %p130 = por %p128, %p129
      %p132 = scmp.ne.s32.totalorder %s117, %s131
      %p133 = scmp.eq.s32.totalorder %s23, 0
      %p134 = por %p132, %p133
      %s135 = ssub.s32 %s17, %s24
      %p136 = scmp.eq.s32.totalorder %s135, 0
      %s138 = sadd.s32 %s137, 1
      %s139 = scalar_select %p136, %s137, %s138
      %p142 = pneg %p136
      %p143 = scmp.eq.s32.totalorder %s17, 1
      %p144 = por %p142, %p143
      %p145 = scmp.ne.s32.totalorder %s137, %s140
      %p146 = scmp.eq.s32.totalorder %s17, 0
      %p147 = por %p145, %p146
      %p148 = scmp.ne.s32.totalorder %s137, %s140
      %p149 = scmp.eq.s32.totalorder %s22, 1
      %p150 = por %p148, %p149
      %p151 = scmp.ne.s32.totalorder %s140, %s141
      %p152 = scmp.eq.s32.totalorder %s22, 0
      %p153 = por %p151, %p152
      %p154 = scmp.ne.s32.totalorder %s140, %s141
      %p155 = scmp.eq.s32.totalorder %s23, 1
      %p156 = por %p154, %p155
      %p158 = scmp.ne.s32.totalorder %s141, %s157
      %p159 = scmp.eq.s32.totalorder %s23, 0
      %p160 = por %p158, %p159
      %p161 = scmp.le.s32.totalorder 1, %s17
      %p162 = scmp.lt.s32.totalorder %s17, 3
      %p163 = pnand %p161, %p162
      %p164 = pneg %p163
      // Predicated region
      $region9: #{tpu_custom_call.1} parent=5 // pred_check
        _
      $region10: #{tpu_custom_call.1} parent=5 // pred_check_branch
        %166 = sbr.rel (%p163) target = $region12
      $region11: #{tpu_custom_call.1} parent=5 // pred_region
        %s167 = ssub.s32 %s17, 1
        // Predicated region
        $region13: #{tpu_custom_call.1} parent=11 // pred_check
          %p168 = pneg %p64
        $region14: #{tpu_custom_call.1} parent=11 // pred_check_branch
          %170 = sbr.rel (%p168) target = $region16
        $region15: #{tpu_custom_call.1} parent=11 // pred_region
          _
        $region16: #{tpu_custom_call.1} parent=11 // pred_fallthru
          _
        // Predicated region
        $region17: #{tpu_custom_call.1} parent=11 // pred_check
          %p171 = pneg %p85
        $region18: #{tpu_custom_call.1} parent=11 // pred_check_branch
          %173 = sbr.rel (%p171) target = $region20
        $region19: #{tpu_custom_call.1} parent=11 // pred_region
          _
        $region20: #{tpu_custom_call.1} parent=11 // pred_fallthru
          _
        // Predicated region
        $region21: #{tpu_custom_call.1} parent=11 // pred_check
          %p174 = pneg %p106
        $region22: #{tpu_custom_call.1} parent=11 // pred_check_branch
          %176 = sbr.rel (%p174) target = $region24
        $region23: #{tpu_custom_call.1} parent=11 // pred_region
          _
        $region24: #{tpu_custom_call.1} parent=11 // pred_fallthru
          _
        // Predicated region
        $region25: #{tpu_custom_call.1} parent=11 // pred_check
          %p177 = pneg %p127
        $region26: #{tpu_custom_call.1} parent=11 // pred_check_branch
          %179 = sbr.rel (%p177) target = $region28
        $region27: #{tpu_custom_call.1} parent=11 // pred_region
          _
        $region28: #{tpu_custom_call.1} parent=11 // pred_fallthru
          _
      $region12: #{tpu_custom_call.1} parent=5 // pred_fallthru
        _
      %p180 = scmp.lt.s32.totalorder %s17, 2
      // Predicated region
      $region29: #{tpu_custom_call.1} parent=5 // pred_check
        %p181 = pneg %p180
      $region30: #{tpu_custom_call.1} parent=5 // pred_check_branch
        %183 = sbr.rel (%p181) target = $region32
      $region31: #{tpu_custom_call.1} parent=5 // pred_region
        // Predicated region
        $region33: #{tpu_custom_call.1} parent=31 // pred_check
          %p184 = pneg %p37
        $region34: #{tpu_custom_call.1} parent=31 // pred_check_branch
          %186 = sbr.rel (%p184) target = $region36
        $region35: #{tpu_custom_call.1} parent=31 // pred_region
          %s187 = sand.u32 %s27, 1
          %s188 = scalar_lea.sflag [#allocation3], %s187
          %s189 = sand.u32 %s27, 1
          %s190 = smul.addr %s189, 32
          %s191 = scalar_lea.vmem [#allocation2], %s190
          %s192 = smul.u32 2, %s17
          %s194 = ssub.s32 512, 512
          %195 = vsyncadd %s188, %s194
          %s196 = smul.addr %s192, 2
          %s197 = smul.addr %s196, 128
          %s198 = scalar_lea.hbm %s0, %s197
          %s199 = sshll.u32 %s191, 4
          %s200 = int_to_ptr.vmem [resolvable:$true] %s199
          %205 = dma.hbm_to_vmem [thread:$0]  %s198, 512, %s200, %s188, 256, 256, 16
        $region36: #{tpu_custom_call.1} parent=31 // pred_fallthru
          _
      $region32: #{tpu_custom_call.1} parent=5 // pred_fallthru
        _
      %p206 = scmp.le.s32.totalorder 1, %s17
      %p207 = scmp.lt.s32.totalorder %s17, 3
      %p208 = pnand %p206, %p207
      %p209 = pneg %p208
      // Predicated region
      $region37: #{tpu_custom_call.1} parent=5 // pred_check
        _
      $region38: #{tpu_custom_call.1} parent=5 // pred_check_branch
        %211 = sbr.rel (%p208) target = $region40
      $region39: #{tpu_custom_call.1} parent=5 // pred_region
        %s212 = ssub.s32 %s17, 1
        %s213 = sand.u32 %s30, 1
        %s214 = scalar_lea.sflag [#allocation3], %s213
        %s215 = sand.u32 %s30, 1
        %s216 = smul.addr %s215, 32
        %s217 = scalar_lea.vmem [#allocation2], %s216
        // Predicated region
        $region41: #{tpu_custom_call.1} parent=39 // pred_check
          %p218 = pneg %p43
        $region42: #{tpu_custom_call.1} parent=39 // pred_check_branch
          %220 = sbr.rel (%p218) target = $region44
        $region43: #{tpu_custom_call.1} parent=39 // pred_region
          %221 = dma.done %s214, 512
        $region44: #{tpu_custom_call.1} parent=39 // pred_fallthru
          _
        %s222 = sand.u32 %s30, 1
        %s223 = scalar_lea.sflag [#allocation3], %s222
        %s224 = sand.u32 %s30, 1
        %s225 = smul.addr %s224, 32
        %s226 = scalar_lea.vmem [#allocation2], %s225
        %p227 = pneg %p43
        %p228 = pneg %p40
        %p229 = pneg %p64
        %p230 = pneg %p61
        %p231 = pneg %p85
        %p232 = pneg %p82
        %p233 = pneg %p106
        %p234 = pneg %p103
        %p235 = pneg %p127
        %p236 = pneg %p124
        %p237 = pneg %p153
        %p238 = pneg %p150
        %s239 = sand.u32 %s140, 1
        %s240 = scalar_lea.sflag [#allocation4], %s239
        %s241 = sand.u32 %s140, 1
        %s242 = smul.addr %s241, 32
        %s243 = scalar_lea.vmem [#allocation5], %s242
        %s244 = smul.u32 2, %s22
        %s245 = smul.u32 2, %s22
        %v246 = vld [vmem:[%s217] sm:$0xff]
        %v247 = vld [vmem:[%s217 + $0x8] sm:$0xff]
        %s248 = scalar_lea.vmem %s217, 16 [#allocation2]
        %v249 = vld [vmem:[%s248] sm:$0xff]
        %v250 = vld [vmem:[%s248 + $0x8] sm:$0xff]
        %v251 = vlaneseq
        %v252 = vand.u32 %v251, 127
        %v253 = vadd.s32 %v252, 128
        %v254 = vadd.s32 %v252, 256
        %v255 = vadd.s32 %v252, 384
        %v256 = vand.u32 %v252, 15
        %v257 = vand.u32 %v253, 15
        %v258 = vand.u32 %v254, 15
        %v259 = vand.u32 %v255, 15
        %v260 = vand.u32 %v252, 255
        %v261 = vand.u32 %v253, 255
        %v262 = vand.u32 %v254, 255
        %v263 = vand.u32 %v255, 255
        %v264 = vshra.s32 %v260, 4
        %v265 = vshra.s32 %v261, 4
        %v266 = vshra.s32 %v262, 4
        %v267 = vshra.s32 %v263, 4
        %vm268 = vcmp.ge.s32.totalorder %v264, 1
        %vm269 = vcmp.ge.s32.totalorder %v265, 1
        %vm270 = vcmp.ge.s32.totalorder %v266, 1
        %vm271 = vcmp.ge.s32.totalorder %v267, 1
        %vm272 = vcmp.le.s32.totalorder %v264, 14
        %vm273 = vcmp.le.s32.totalorder %v265, 14
        %vm274 = vcmp.le.s32.totalorder %v266, 14
        %vm275 = vcmp.le.s32.totalorder %v267, 14
        %vm276 = vcmp.ge.s32.totalorder %v256, 1
        %vm277 = vcmp.ge.s32.totalorder %v257, 1
        %vm278 = vcmp.ge.s32.totalorder %v258, 1
        %vm279 = vcmp.ge.s32.totalorder %v259, 1
        %vm280 = vcmp.le.s32.totalorder %v256, 14
        %vm281 = vcmp.le.s32.totalorder %v257, 14
        %vm282 = vcmp.le.s32.totalorder %v258, 14
        %vm283 = vcmp.le.s32.totalorder %v259, 14
        %vm284 = vmand %vm268, %vm276
        %vm285 = vmand %vm269, %vm277
        %vm286 = vmand %vm270, %vm278
        %vm287 = vmand %vm271, %vm279
        %v288 = vsel %vm284, 1.0, 0.0
        %v289 = vsel %vm285, 1.0, 0.0
        %v290 = vsel %vm286, 1.0, 0.0
        %v291 = vsel %vm287, 1.0, 0.0
        %v292 = vsel %vm268, 1.0, 0.0
        %v293 = vsel %vm269, 1.0, 0.0
        %v294 = vsel %vm270, 1.0, 0.0
        %v295 = vsel %vm271, 1.0, 0.0
        %vm296 = vmand %vm268, %vm280
        %vm297 = vmand %vm269, %vm281
        %vm298 = vmand %vm270, %vm282
        %vm299 = vmand %vm271, %vm283
        %v300 = vsel %vm296, 1.0, 0.0
        %v301 = vsel %vm297, 1.0, 0.0
        %v302 = vsel %vm298, 1.0, 0.0
        %v303 = vsel %vm299, 1.0, 0.0
        %v304 = vsel %vm276, 1.0, 0.0
        %v305 = vsel %vm277, 1.0, 0.0
        %v306 = vsel %vm278, 1.0, 0.0
        %v307 = vsel %vm279, 1.0, 0.0
        %v308 = vsel %vm280, 1.0, 0.0
        %v309 = vsel %vm281, 1.0, 0.0
        %v310 = vsel %vm282, 1.0, 0.0
        %v311 = vsel %vm283, 1.0, 0.0
        %vm312 = vmand %vm272, %vm276
        %vm313 = vmand %vm273, %vm277
        %vm314 = vmand %vm274, %vm278
        %vm315 = vmand %vm275, %vm279
        %v316 = vsel %vm312, 1.0, 0.0
        %v317 = vsel %vm313, 1.0, 0.0
        %v318 = vsel %vm314, 1.0, 0.0
        %v319 = vsel %vm315, 1.0, 0.0
        %v320 = vsel %vm272, 1.0, 0.0
        %v321 = vsel %vm273, 1.0, 0.0
        %v322 = vsel %vm274, 1.0, 0.0
        %v323 = vsel %vm275, 1.0, 0.0
        %vm324 = vmand %vm272, %vm280
        %vm325 = vmand %vm273, %vm281
        %vm326 = vmand %vm274, %vm282
        %vm327 = vmand %vm275, %vm283
        %v328 = vsel %vm324, 1.0, 0.0
        %v329 = vsel %vm325, 1.0, 0.0
        %v330 = vsel %vm326, 1.0, 0.0
        %v331 = vsel %vm327, 1.0, 0.0
        %332 = vrot.lane.b32.xlu0 %v246, 17
        %v333 = vpop.permute.xlu0 %332
        %334 = vrot.lane.b32.xlu0 %v247, 17
        %v335 = vpop.permute.xlu0 %334
        %336 = vrot.lane.b32.xlu0 %v249, 17
        %v337 = vpop.permute.xlu0 %336
        %338 = vrot.lane.b32.xlu0 %v250, 17
        %v339 = vpop.permute.xlu0 %338
        %vm340 = vcmp.lt.s32.totalorder %v252, 17
        %v341 = vsel %vm340, %v337, %v339
        %v342 = vsel %vm340, %v335, %v337
        %v343 = vsel %vm340, %v333, %v335
        %v344 = vsel %vm340, %v339, %v333
        %v345 = vmul.f32 %v344, %v288
        %v346 = vmul.f32 %v343, %v289
        %v347 = vmul.f32 %v342, %v290
        %v348 = vmul.f32 %v341, %v291
        %349 = vrot.lane.b32.xlu0 %v246, 16
        %v350 = vpop.permute.xlu0 %349
        %351 = vrot.lane.b32.xlu0 %v247, 16
        %v352 = vpop.permute.xlu0 %351
        %353 = vrot.lane.b32.xlu0 %v249, 16
        %v354 = vpop.permute.xlu0 %353
        %355 = vrot.lane.b32.xlu0 %v250, 16
        %v356 = vpop.permute.xlu0 %355
        %vm357 = vcmp.lt.s32.totalorder %v252, 16
        %v358 = vsel %vm357, %v354, %v356
        %v359 = vsel %vm357, %v352, %v354
        %v360 = vsel %vm357, %v350, %v352
        %v361 = vsel %vm357, %v356, %v350
        %v362 = vmul.f32 %v361, %v292
        %v363 = vmul.f32 %v360, %v293
        %v364 = vmul.f32 %v359, %v294
        %v365 = vmul.f32 %v358, %v295
        %366 = vrot.lane.b32.xlu0 %v246, 15
        %v367 = vpop.permute.xlu0 %366
        %368 = vrot.lane.b32.xlu0 %v247, 15
        %v369 = vpop.permute.xlu0 %368
        %370 = vrot.lane.b32.xlu0 %v249, 15
        %v371 = vpop.permute.xlu0 %370
        %372 = vrot.lane.b32.xlu0 %v250, 15
        %v373 = vpop.permute.xlu0 %372
        %vm374 = vcmp.lt.s32.totalorder %v252, 15
        %v375 = vsel %vm374, %v371, %v373
        %v376 = vsel %vm374, %v369, %v371
        %v377 = vsel %vm374, %v367, %v369
        %v378 = vsel %vm374, %v373, %v367
        %v379 = vmul.f32 %v378, %v300
        %v380 = vmul.f32 %v377, %v301
        %v381 = vmul.f32 %v376, %v302
        %v382 = vmul.f32 %v375, %v303
        %383 = vrot.lane.b32.xlu0 %v246, 1
        %v384 = vpop.permute.xlu0 %383
        %385 = vrot.lane.b32.xlu0 %v247, 1
        %v386 = vpop.permute.xlu0 %385
        %387 = vrot.lane.b32.xlu0 %v249, 1
        %v388 = vpop.permute.xlu0 %387
        %389 = vrot.lane.b32.xlu0 %v250, 1
        %v390 = vpop.permute.xlu0 %389
        %vm391 = vcmp.lt.s32.totalorder %v252, 1
        %v392 = vsel %vm391, %v388, %v390
        %v393 = vsel %vm391, %v386, %v388
        %v394 = vsel %vm391, %v384, %v386
        %v395 = vsel %vm391, %v390, %v384
        %v396 = vmul.f32 %v395, %v304
        %v397 = vmul.f32 %v394, %v305
        %v398 = vmul.f32 %v393, %v306
        %v399 = vmul.f32 %v392, %v307
        %400 = vrot.lane.b32.xlu0 %v246, 127
        %v401 = vpop.permute.xlu0 %400
        %402 = vrot.lane.b32.xlu0 %v247, 127
        %v403 = vpop.permute.xlu0 %402
        %404 = vrot.lane.b32.xlu0 %v249, 127
        %v405 = vpop.permute.xlu0 %404
        %406 = vrot.lane.b32.xlu0 %v250, 127
        %v407 = vpop.permute.xlu0 %406
        %vm408 = vcmp.lt.s32.totalorder %v252, 127
        %v409 = vsel %vm408, %v405, %v407
        %v410 = vsel %vm408, %v403, %v405
        %v411 = vsel %vm408, %v401, %v403
        %v412 = vsel %vm408, %v407, %v401
        %v413 = vmul.f32 %v411, %v308
        %v414 = vmul.f32 %v410, %v309
        %v415 = vmul.f32 %v409, %v310
        %v416 = vmul.f32 %v412, %v311
        %417 = vrot.lane.b32.xlu0 %v246, 113
        %v418 = vpop.permute.xlu0 %417
        %419 = vrot.lane.b32.xlu0 %v247, 113
        %v420 = vpop.permute.xlu0 %419
        %421 = vrot.lane.b32.xlu0 %v249, 113
        %v422 = vpop.permute.xlu0 %421
        %423 = vrot.lane.b32.xlu0 %v250, 113
        %v424 = vpop.permute.xlu0 %423
        %vm425 = vcmp.lt.s32.totalorder %v252, 113
        %v426 = vsel %vm425, %v422, %v424
        %v427 = vsel %vm425, %v420, %v422
        %v428 = vsel %vm425, %v418, %v420
        %v429 = vsel %vm425, %v424, %v418
        %v430 = vmul.f32 %v428, %v316
        %v431 = vmul.f32 %v427, %v317
        %v432 = vmul.f32 %v426, %v318
        %v433 = vmul.f32 %v429, %v319
        %434 = vrot.lane.b32.xlu0 %v246, 112
        %v435 = vpop.permute.xlu0 %434
        %436 = vrot.lane.b32.xlu0 %v247, 112
        %v437 = vpop.permute.xlu0 %436
        %438 = vrot.lane.b32.xlu0 %v249, 112
        %v439 = vpop.permute.xlu0 %438
        %440 = vrot.lane.b32.xlu0 %v250, 112
        %v441 = vpop.permute.xlu0 %440
        %vm442 = vcmp.lt.s32.totalorder %v252, 112
        %v443 = vsel %vm442, %v439, %v441
        %v444 = vsel %vm442, %v437, %v439
        %v445 = vsel %vm442, %v435, %v437
        %v446 = vsel %vm442, %v441, %v435
        %v447 = vmul.f32 %v445, %v320
        %v448 = vmul.f32 %v444, %v321
        %v449 = vmul.f32 %v443, %v322
        %v450 = vmul.f32 %v446, %v323
        %451 = vrot.lane.b32.xlu0 %v246, 111
        %v452 = vpop.permute.xlu0 %451
        %453 = vrot.lane.b32.xlu0 %v247, 111
        %v454 = vpop.permute.xlu0 %453
        %455 = vrot.lane.b32.xlu0 %v249, 111
        %v456 = vpop.permute.xlu0 %455
        %457 = vrot.lane.b32.xlu0 %v250, 111
        %v458 = vpop.permute.xlu0 %457
        %vm459 = vcmp.lt.s32.totalorder %v252, 111
        %v460 = vsel %vm459, %v456, %v458
        %v461 = vsel %vm459, %v454, %v456
        %v462 = vsel %vm459, %v452, %v454
        %v463 = vsel %vm459, %v458, %v452
        %v464 = vmul.f32 %v462, %v328
        %v465 = vmul.f32 %v461, %v329
        %v466 = vmul.f32 %v460, %v330
        %v467 = vmul.f32 %v463, %v331
        %v468 = vld [vmem:[%s1] sm:$0xff]
        %v469 = vld [vmem:[%s2] sm:$0xff]
        %471 = vset.pattern.permute.xlu0 0
        %472 = vperm.xlu0 %471, %v469
        %v473 = vpop.permute.xlu0 %472
        %vm475 = vcmask 588800
        %v477 = vsel %vm475, %v468, 0
        %479 = vmatprep.subr.mxu0 0.0
        %480 = vmatpush1.msra.mxu0 0.0
        %481 = vmatprep.subr.mxu0 0.0
        %482 = vmatpush1.msra.mxu0 0.0
        %483 = vmatprep.subr.mxu0 0.0
        %484 = vmatpush1.msra.mxu0 0.0
        %485 = vmatprep.subr.mxu0 0.0
        %486 = vmatpush1.msra.mxu0 0.0
        %487 = vmatprep.subr.mxu0 0.0
        %488 = vmatpush1.msra.mxu0 0.0
        %489 = vmatprep.subr.mxu0 0.0
        %490 = vmatpush1.msra.mxu0 0.0
        %491 = vmatprep.subr.mxu0 0.0
        %492 = vmatpush1.msra.mxu0 0.0
        %493 = vmatprep.subr.mxu0 %v465
        %494 = vmatpush1.msra.mxu0 %v464
        %495 = vmatprep.subr.mxu0 %v448
        %496 = vmatpush1.msra.mxu0 %v447
        %497 = vmatprep.subr.mxu0 %v431
        %498 = vmatpush1.msra.mxu0 %v430
        %499 = vmatprep.subr.mxu0 %v414
        %500 = vmatpush1.msra.mxu0 %v413
        %501 = vmatprep.subr.mxu0 %v247
        %502 = vmatpush1.msra.mxu0 %v246
        %503 = vmatprep.subr.mxu0 %v397
        %504 = vmatpush1.msra.mxu0 %v396
        %505 = vmatprep.subr.mxu0 %v380
        %506 = vmatpush1.msra.mxu0 %v379
        %507 = vmatprep.subr.mxu0 %v363
        %508 = vmatpush1.msra.mxu0 %v362
        %509 = vmatprep.subr.mxu0 %v346
        %510 = vmatpush1.msra.mxu0 %v345
        %511 = vmatprep.subr.mxu0 0.0
        %512 = vmatpush2.msra.mxu0 0.0
        %513 = vmatprep.subr.mxu0 0.0
        %514 = vmatpush2.msra.mxu0 0.0
        %515 = vmatprep.subr.mxu0 0.0
        %516 = vmatpush2.msra.mxu0 0.0
        %517 = vmatprep.subr.mxu0 0.0
        %518 = vmatpush2.msra.mxu0 0.0
        %519 = vmatprep.subr.mxu0 0.0
        %520 = vmatpush2.msra.mxu0 0.0
        %521 = vmatprep.subr.mxu0 0.0
        %522 = vmatpush2.msra.mxu0 0.0
        %523 = vmatprep.subr.mxu0 0.0
        %524 = vmatpush2.msra.mxu0 0.0
        %525 = vmatprep.subr.mxu0 0.0
        %526 = vmatpush2.msra.mxu0 0.0
        %527 = vmatprep.subr.mxu0 0.0
        %528 = vmatpush2.msra.mxu0 0.0
        %529 = vmatprep.subr.mxu0 0.0
        %530 = vmatpush2.msra.mxu0 0.0
        %531 = vmatprep.subr.mxu0 0.0
        %532 = vmatpush2.msra.mxu0 0.0
        %533 = vmatprep.subr.mxu0 0.0
        %534 = vmatpush2.msra.mxu0 0.0
        %535 = vmatprep.subr.mxu0 0.0
        %536 = vmatpush2.msra.mxu0 0.0
        %537 = vmatprep.subr.mxu0 0.0
        %538 = vmatpush2.msra.mxu0 0.0
        %539 = vmatprep.subr.mxu0 0.0
        %540 = vmatpush2.msra.mxu0 0.0
        %541 = vmatprep.subr.mxu0 0.0
        %542 = vmatpush2.msra.mxu0 0.0
        %543 = vmatprep.mubr.f32.mxu0 0.0
        %544 = vmatmul.mubr.f32.gmra.mxu0 %v477
        %v545 = vpop.f32.mrf.mxu0
        %v546 = vadd.f32 %v473, %v545
        %v547 = vpop.f32.mrf.mxu0
        %v548 = vadd.f32 %v473, %v547
        %549 = vdwg.mxu0
        %550 = vmatprep.subr.mxu0 0.0
        %551 = vmatpush1.msra.mxu0 0.0
        %552 = vmatprep.subr.mxu0 0.0
        %553 = vmatpush1.msra.mxu0 0.0
        %554 = vmatprep.subr.mxu0 0.0
        %555 = vmatpush1.msra.mxu0 0.0
        %556 = vmatprep.subr.mxu0 0.0
        %557 = vmatpush1.msra.mxu0 0.0
        %558 = vmatprep.subr.mxu0 0.0
        %559 = vmatpush1.msra.mxu0 0.0
        %560 = vmatprep.subr.mxu0 0.0
        %561 = vmatpush1.msra.mxu0 0.0
        %562 = vmatprep.subr.mxu0 0.0
        %563 = vmatpush1.msra.mxu0 0.0
        %564 = vmatprep.subr.mxu0 %v467
        %565 = vmatpush1.msra.mxu0 %v466
        %566 = vmatprep.subr.mxu0 %v450
        %567 = vmatpush1.msra.mxu0 %v449
        %568 = vmatprep.subr.mxu0 %v433
        %569 = vmatpush1.msra.mxu0 %v432
        %570 = vmatprep.subr.mxu0 %v416
        %571 = vmatpush1.msra.mxu0 %v415
        %572 = vmatprep.subr.mxu0 %v250
        %573 = vmatpush1.msra.mxu0 %v249
        %574 = vmatprep.subr.mxu0 %v399
        %575 = vmatpush1.msra.mxu0 %v398
        %576 = vmatprep.subr.mxu0 %v382
        %577 = vmatpush1.msra.mxu0 %v381
        %578 = vmatprep.subr.mxu0 %v365
        %579 = vmatpush1.msra.mxu0 %v364
        %580 = vmatprep.subr.mxu0 %v348
        %581 = vmatpush1.msra.mxu0 %v347
        %582 = vmatprep.subr.mxu0 0.0
        %583 = vmatpush2.msra.mxu0 0.0
        %584 = vmatprep.subr.mxu0 0.0
        %585 = vmatpush2.msra.mxu0 0.0
        %586 = vmatprep.subr.mxu0 0.0
        %587 = vmatpush2.msra.mxu0 0.0
        %588 = vmatprep.subr.mxu0 0.0
        %589 = vmatpush2.msra.mxu0 0.0
        %590 = vmatprep.subr.mxu0 0.0
        %591 = vmatpush2.msra.mxu0 0.0
        %592 = vmatprep.subr.mxu0 0.0
        %593 = vmatpush2.msra.mxu0 0.0
        %594 = vmatprep.subr.mxu0 0.0
        %595 = vmatpush2.msra.mxu0 0.0
        %596 = vmatprep.subr.mxu0 0.0
        %597 = vmatpush2.msra.mxu0 0.0
        %598 = vmatprep.subr.mxu0 0.0
        %599 = vmatpush2.msra.mxu0 0.0
        %600 = vmatprep.subr.mxu0 0.0
        %601 = vmatpush2.msra.mxu0 0.0
        %602 = vmatprep.subr.mxu0 0.0
        %603 = vmatpush2.msra.mxu0 0.0
        %604 = vmatprep.subr.mxu0 0.0
        %605 = vmatpush2.msra.mxu0 0.0
        %606 = vmatprep.subr.mxu0 0.0
        %607 = vmatpush2.msra.mxu0 0.0
        %608 = vmatprep.subr.mxu0 0.0
        %609 = vmatpush2.msra.mxu0 0.0
        %610 = vmatprep.subr.mxu0 0.0
        %611 = vmatpush2.msra.mxu0 0.0
        %612 = vmatprep.subr.mxu0 0.0
        %613 = vmatpush2.msra.mxu0 0.0
        %614 = vmatprep.mubr.f32.mxu0 0.0
        %615 = vmatmul.mubr.f32.gmra.mxu0 %v477
        %v616 = vpop.f32.mrf.mxu0
        %v617 = vadd.f32 %v473, %v616
        %v618 = vpop.f32.mrf.mxu0
        %v619 = vadd.f32 %v473, %v618
        %620 = vdwg.mxu0
        %v621 = vmax.f32 %v546, 0.0
        %v622 = vmax.f32 %v548, 0.0
        %v623 = vmax.f32 %v617, 0.0
        %v624 = vmax.f32 %v619, 0.0
        %625 = vrot.lane.b32.xlu0 %v621, 17
        %v626 = vpop.permute.xlu0 %625
        %627 = vrot.lane.b32.xlu0 %v622, 17
        %v628 = vpop.permute.xlu0 %627
        %629 = vrot.lane.b32.xlu0 %v623, 17
        %v630 = vpop.permute.xlu0 %629
        %631 = vrot.lane.b32.xlu0 %v624, 17
        %v632 = vpop.permute.xlu0 %631
        %v633 = vsel %vm340, %v630, %v632
        %v634 = vsel %vm340, %v628, %v630
        %v635 = vsel %vm340, %v626, %v628
        %v636 = vsel %vm340, %v632, %v626
        %v637 = vmul.f32 %v636, %v288
        %v638 = vmul.f32 %v635, %v289
        %v639 = vmul.f32 %v634, %v290
        %v640 = vmul.f32 %v633, %v291
        %641 = vrot.lane.b32.xlu0 %v621, 16
        %v642 = vpop.permute.xlu0 %641
        %643 = vrot.lane.b32.xlu0 %v622, 16
        %v644 = vpop.permute.xlu0 %643
        %645 = vrot.lane.b32.xlu0 %v623, 16
        %v646 = vpop.permute.xlu0 %645
        %647 = vrot.lane.b32.xlu0 %v624, 16
        %v648 = vpop.permute.xlu0 %647
        %v649 = vsel %vm357, %v646, %v648
        %v650 = vsel %vm357, %v644, %v646
        %v651 = vsel %vm357, %v642, %v644
        %v652 = vsel %vm357, %v648, %v642
        %v653 = vmul.f32 %v652, %v292
        %v654 = vmul.f32 %v651, %v293
        %v655 = vmul.f32 %v650, %v294
        %v656 = vmul.f32 %v649, %v295
        %657 = vrot.lane.b32.xlu0 %v621, 15
        %v658 = vpop.permute.xlu0 %657
        %659 = vrot.lane.b32.xlu0 %v622, 15
        %v660 = vpop.permute.xlu0 %659
        %661 = vrot.lane.b32.xlu0 %v623, 15
        %v662 = vpop.permute.xlu0 %661
        %663 = vrot.lane.b32.xlu0 %v624, 15
        %v664 = vpop.permute.xlu0 %663
        %v665 = vsel %vm374, %v662, %v664
        %v666 = vsel %vm374, %v660, %v662
        %v667 = vsel %vm374, %v658, %v660
        %v668 = vsel %vm374, %v664, %v658
        %v669 = vmul.f32 %v668, %v300
        %v670 = vmul.f32 %v667, %v301
        %v671 = vmul.f32 %v666, %v302
        %v672 = vmul.f32 %v665, %v303
        %673 = vrot.lane.b32.xlu0 %v621, 1
        %v674 = vpop.permute.xlu0 %673
        %675 = vrot.lane.b32.xlu0 %v622, 1
        %v676 = vpop.permute.xlu0 %675
        %677 = vrot.lane.b32.xlu0 %v623, 1
        %v678 = vpop.permute.xlu0 %677
        %679 = vrot.lane.b32.xlu0 %v624, 1
        %v680 = vpop.permute.xlu0 %679
        %v681 = vsel %vm391, %v678, %v680
        %v682 = vsel %vm391, %v676, %v678
        %v683 = vsel %vm391, %v674, %v676
        %v684 = vsel %vm391, %v680, %v674
        %v685 = vmul.f32 %v684, %v304
        %v686 = vmul.f32 %v683, %v305
        %v687 = vmul.f32 %v682, %v306
        %v688 = vmul.f32 %v681, %v307
        %689 = vrot.lane.b32.xlu0 %v621, 127
        %v690 = vpop.permute.xlu0 %689
        %691 = vrot.lane.b32.xlu0 %v622, 127
        %v692 = vpop.permute.xlu0 %691
        %693 = vrot.lane.b32.xlu0 %v623, 127
        %v694 = vpop.permute.xlu0 %693
        %695 = vrot.lane.b32.xlu0 %v624, 127
        %v696 = vpop.permute.xlu0 %695
        %v697 = vsel %vm408, %v694, %v696
        %v698 = vsel %vm408, %v692, %v694
        %v699 = vsel %vm408, %v690, %v692
        %v700 = vsel %vm408, %v696, %v690
        %v701 = vmul.f32 %v699, %v308
        %v702 = vmul.f32 %v698, %v309
        %v703 = vmul.f32 %v697, %v310
        %v704 = vmul.f32 %v700, %v311
        %705 = vrot.lane.b32.xlu0 %v621, 113
        %v706 = vpop.permute.xlu0 %705
        %707 = vrot.lane.b32.xlu0 %v622, 113
        %v708 = vpop.permute.xlu0 %707
        %709 = vrot.lane.b32.xlu0 %v623, 113
        %v710 = vpop.permute.xlu0 %709
        %711 = vrot.lane.b32.xlu0 %v624, 113
        %v712 = vpop.permute.xlu0 %711
        %v713 = vsel %vm425, %v710, %v712
        %v714 = vsel %vm425, %v708, %v710
        %v715 = vsel %vm425, %v706, %v708
        %v716 = vsel %vm425, %v712, %v706
        %v717 = vmul.f32 %v715, %v316
        %v718 = vmul.f32 %v714, %v317
        %v719 = vmul.f32 %v713, %v318
        %v720 = vmul.f32 %v716, %v319
        %721 = vrot.lane.b32.xlu0 %v621, 112
        %v722 = vpop.permute.xlu0 %721
        %723 = vrot.lane.b32.xlu0 %v622, 112
        %v724 = vpop.permute.xlu0 %723
        %725 = vrot.lane.b32.xlu0 %v623, 112
        %v726 = vpop.permute.xlu0 %725
        %727 = vrot.lane.b32.xlu0 %v624, 112
        %v728 = vpop.permute.xlu0 %727
        %v729 = vsel %vm442, %v726, %v728
        %v730 = vsel %vm442, %v724, %v726
        %v731 = vsel %vm442, %v722, %v724
        %v732 = vsel %vm442, %v728, %v722
        %v733 = vmul.f32 %v731, %v320
        %v734 = vmul.f32 %v730, %v321
        %v735 = vmul.f32 %v729, %v322
        %v736 = vmul.f32 %v732, %v323
        %737 = vrot.lane.b32.xlu0 %v621, 111
        %v738 = vpop.permute.xlu0 %737
        %739 = vrot.lane.b32.xlu0 %v622, 111
        %v740 = vpop.permute.xlu0 %739
        %741 = vrot.lane.b32.xlu0 %v623, 111
        %v742 = vpop.permute.xlu0 %741
        %743 = vrot.lane.b32.xlu0 %v624, 111
        %v744 = vpop.permute.xlu0 %743
        %v745 = vsel %vm459, %v742, %v744
        %v746 = vsel %vm459, %v740, %v742
        %v747 = vsel %vm459, %v738, %v740
        %v748 = vsel %vm459, %v744, %v738
        %v749 = vmul.f32 %v747, %v328
        %v750 = vmul.f32 %v746, %v329
        %v751 = vmul.f32 %v745, %v330
        %v752 = vmul.f32 %v748, %v331
        %v753 = vld [vmem:[%s3] sm:$0xff]
        %v754 = vld [vmem:[%s4] sm:$0xff]
        %756 = vset.pattern.permute.xlu0 0
        %757 = vperm.xlu0 %756, %v754
        %v758 = vpop.permute.xlu0 %757
        %v761 = vsel %vm475, %v753, 0
        %763 = vmatprep.subr.mxu0 0.0
        %764 = vmatpush1.msra.mxu0 0.0
        %765 = vmatprep.subr.mxu0 0.0
        %766 = vmatpush1.msra.mxu0 0.0
        %767 = vmatprep.subr.mxu0 0.0
        %768 = vmatpush1.msra.mxu0 0.0
        %769 = vmatprep.subr.mxu0 0.0
        %770 = vmatpush1.msra.mxu0 0.0
        %771 = vmatprep.subr.mxu0 0.0
        %772 = vmatpush1.msra.mxu0 0.0
        %773 = vmatprep.subr.mxu0 0.0
        %774 = vmatpush1.msra.mxu0 0.0
        %775 = vmatprep.subr.mxu0 0.0
        %776 = vmatpush1.msra.mxu0 0.0
        %777 = vmatprep.subr.mxu0 %v750
        %778 = vmatpush1.msra.mxu0 %v749
        %779 = vmatprep.subr.mxu0 %v734
        %780 = vmatpush1.msra.mxu0 %v733
        %781 = vmatprep.subr.mxu0 %v718
        %782 = vmatpush1.msra.mxu0 %v717
        %783 = vmatprep.subr.mxu0 %v702
        %784 = vmatpush1.msra.mxu0 %v701
        %785 = vmatprep.subr.mxu0 %v622
        %786 = vmatpush1.msra.mxu0 %v621
        %787 = vmatprep.subr.mxu0 %v686
        %788 = vmatpush1.msra.mxu0 %v685
        %789 = vmatprep.subr.mxu0 %v670
        %790 = vmatpush1.msra.mxu0 %v669
        %791 = vmatprep.subr.mxu0 %v654
        %792 = vmatpush1.msra.mxu0 %v653
        %793 = vmatprep.subr.mxu0 %v638
        %794 = vmatpush1.msra.mxu0 %v637
        %795 = vmatprep.subr.mxu0 0.0
        %796 = vmatpush2.msra.mxu0 0.0
        %797 = vmatprep.subr.mxu0 0.0
        %798 = vmatpush2.msra.mxu0 0.0
        %799 = vmatprep.subr.mxu0 0.0
        %800 = vmatpush2.msra.mxu0 0.0
        %801 = vmatprep.subr.mxu0 0.0
        %802 = vmatpush2.msra.mxu0 0.0
        %803 = vmatprep.subr.mxu0 0.0
        %804 = vmatpush2.msra.mxu0 0.0
        %805 = vmatprep.subr.mxu0 0.0
        %806 = vmatpush2.msra.mxu0 0.0
        %807 = vmatprep.subr.mxu0 0.0
        %808 = vmatpush2.msra.mxu0 0.0
        %809 = vmatprep.subr.mxu0 0.0
        %810 = vmatpush2.msra.mxu0 0.0
        %811 = vmatprep.subr.mxu0 0.0
        %812 = vmatpush2.msra.mxu0 0.0
        %813 = vmatprep.subr.mxu0 0.0
        %814 = vmatpush2.msra.mxu0 0.0
        %815 = vmatprep.subr.mxu0 0.0
        %816 = vmatpush2.msra.mxu0 0.0
        %817 = vmatprep.subr.mxu0 0.0
        %818 = vmatpush2.msra.mxu0 0.0
        %819 = vmatprep.subr.mxu0 0.0
        %820 = vmatpush2.msra.mxu0 0.0
        %821 = vmatprep.subr.mxu0 0.0
        %822 = vmatpush2.msra.mxu0 0.0
        %823 = vmatprep.subr.mxu0 0.0
        %824 = vmatpush2.msra.mxu0 0.0
        %825 = vmatprep.subr.mxu0 0.0
        %826 = vmatpush2.msra.mxu0 0.0
        %827 = vmatprep.mubr.f32.mxu0 0.0
        %828 = vmatmul.mubr.f32.gmra.mxu0 %v761
        %v829 = vpop.f32.mrf.mxu0
        %v830 = vadd.f32 %v758, %v829
        %v831 = vpop.f32.mrf.mxu0
        %v832 = vadd.f32 %v758, %v831
        %833 = vdwg.mxu0
        %834 = vmatprep.subr.mxu0 0.0
        %835 = vmatpush1.msra.mxu0 0.0
        %836 = vmatprep.subr.mxu0 0.0
        %837 = vmatpush1.msra.mxu0 0.0
        %838 = vmatprep.subr.mxu0 0.0
        %839 = vmatpush1.msra.mxu0 0.0
        %840 = vmatprep.subr.mxu0 0.0
        %841 = vmatpush1.msra.mxu0 0.0
        %842 = vmatprep.subr.mxu0 0.0
        %843 = vmatpush1.msra.mxu0 0.0
        %844 = vmatprep.subr.mxu0 0.0
        %845 = vmatpush1.msra.mxu0 0.0
        %846 = vmatprep.subr.mxu0 0.0
        %847 = vmatpush1.msra.mxu0 0.0
        %848 = vmatprep.subr.mxu0 %v752
        %849 = vmatpush1.msra.mxu0 %v751
        %850 = vmatprep.subr.mxu0 %v736
        %851 = vmatpush1.msra.mxu0 %v735
        %852 = vmatprep.subr.mxu0 %v720
        %853 = vmatpush1.msra.mxu0 %v719
        %854 = vmatprep.subr.mxu0 %v704
        %855 = vmatpush1.msra.mxu0 %v703
        %856 = vmatprep.subr.mxu0 %v624
        %857 = vmatpush1.msra.mxu0 %v623
        %858 = vmatprep.subr.mxu0 %v688
        %859 = vmatpush1.msra.mxu0 %v687
        %860 = vmatprep.subr.mxu0 %v672
        %861 = vmatpush1.msra.mxu0 %v671
        %862 = vmatprep.subr.mxu0 %v656
        %863 = vmatpush1.msra.mxu0 %v655
        %864 = vmatprep.subr.mxu0 %v640
        %865 = vmatpush1.msra.mxu0 %v639
        %866 = vmatprep.subr.mxu0 0.0
        %867 = vmatpush2.msra.mxu0 0.0
        %868 = vmatprep.subr.mxu0 0.0
        %869 = vmatpush2.msra.mxu0 0.0
        %870 = vmatprep.subr.mxu0 0.0
        %871 = vmatpush2.msra.mxu0 0.0
        %872 = vmatprep.subr.mxu0 0.0
        %873 = vmatpush2.msra.mxu0 0.0
        %874 = vmatprep.subr.mxu0 0.0
        %875 = vmatpush2.msra.mxu0 0.0
        %876 = vmatprep.subr.mxu0 0.0
        %877 = vmatpush2.msra.mxu0 0.0
        %878 = vmatprep.subr.mxu0 0.0
        %879 = vmatpush2.msra.mxu0 0.0
        %880 = vmatprep.subr.mxu0 0.0
        %881 = vmatpush2.msra.mxu0 0.0
        %882 = vmatprep.subr.mxu0 0.0
        %883 = vmatpush2.msra.mxu0 0.0
        %884 = vmatprep.subr.mxu0 0.0
        %885 = vmatpush2.msra.mxu0 0.0
        %886 = vmatprep.subr.mxu0 0.0
        %887 = vmatpush2.msra.mxu0 0.0
        %888 = vmatprep.subr.mxu0 0.0
        %889 = vmatpush2.msra.mxu0 0.0
        %890 = vmatprep.subr.mxu0 0.0
        %891 = vmatpush2.msra.mxu0 0.0
        %892 = vmatprep.subr.mxu0 0.0
        %893 = vmatpush2.msra.mxu0 0.0
        %894 = vmatprep.subr.mxu0 0.0
        %895 = vmatpush2.msra.mxu0 0.0
        %896 = vmatprep.subr.mxu0 0.0
        %897 = vmatpush2.msra.mxu0 0.0
        %898 = vmatprep.mubr.f32.mxu0 0.0
        %899 = vmatmul.mubr.f32.gmra.mxu0 %v761
        %v900 = vpop.f32.mrf.mxu0
        %v901 = vadd.f32 %v758, %v900
        %v902 = vpop.f32.mrf.mxu0
        %v903 = vadd.f32 %v758, %v902
        %904 = vdwg.mxu0
        %v905 = vadd.f32 %v830, %v246
        %v906 = vadd.f32 %v832, %v247
        %v907 = vadd.f32 %v901, %v249
        %v908 = vadd.f32 %v903, %v250
        %v909 = vmax.f32 %v905, 0.0
        %v910 = vmax.f32 %v906, 0.0
        %v911 = vmax.f32 %v907, 0.0
        %v912 = vmax.f32 %v908, 0.0
        %913 = vst [vmem:[%s243] sm:$0xff] %v909
        %914 = vst [vmem:[%s243 + $0x8] sm:$0xff] %v910
        %s915 = scalar_lea.vmem %s243, 16 [#allocation5]
        %916 = vst [vmem:[%s915] sm:$0xff] %v911
        %917 = vst [vmem:[%s915 + $0x8] sm:$0xff] %v912
        %s918 = sand.u32 %s140, 1
        %s919 = scalar_lea.sflag [#allocation4], %s918
        %s920 = sand.u32 %s140, 1
        %s921 = smul.addr %s920, 32
        %s922 = scalar_lea.vmem [#allocation5], %s921
        // Predicated region
        $region45: #{tpu_custom_call.1} parent=39 // pred_check
          %p923 = pneg %p150
        $region46: #{tpu_custom_call.1} parent=39 // pred_check_branch
          %925 = sbr.rel (%p923) target = $region48
        $region47: #{tpu_custom_call.1} parent=39 // pred_region
          %s926 = smul.u32 2, %s22
          %s928 = ssub.s32 512, 512
          %929 = vsyncadd %s919, %s928
          %s930 = smul.addr %s926, 2
          %s931 = smul.addr %s930, 128
          %s932 = scalar_lea.hbm %s5, %s931
          %s933 = sshll.u32 %s922, 4
          %s934 = int_to_ptr.vmem [resolvable:$true] %s933
          %939 = dma.vmem_to_hbm [thread:$0]  %s934, 512, %s932, %s919, 256, 256, 16
        $region48: #{tpu_custom_call.1} parent=39 // pred_fallthru
          _
      $region40: #{tpu_custom_call.1} parent=5 // pred_fallthru
        _
      %p940 = scmp.le.s32.totalorder 2, %s17
      // Predicated region
      $region49: #{tpu_custom_call.1} parent=5 // pred_check
        %p941 = pneg %p940
      $region50: #{tpu_custom_call.1} parent=5 // pred_check_branch
        %943 = sbr.rel (%p941) target = $region52
      $region51: #{tpu_custom_call.1} parent=5 // pred_region
        %s944 = ssub.s32 %s17, 2
        // Predicated region
        $region53: #{tpu_custom_call.1} parent=51 // pred_check
          %p945 = pneg %p156
        $region54: #{tpu_custom_call.1} parent=51 // pred_check_branch
          %947 = sbr.rel (%p945) target = $region56
        $region55: #{tpu_custom_call.1} parent=51 // pred_region
          %s948 = sand.u32 %s141, 1
          %s949 = scalar_lea.sflag [#allocation4], %s948
          %s950 = sand.u32 %s141, 1
          %s951 = smul.addr %s950, 32
          %s952 = scalar_lea.vmem [#allocation5], %s951
          %953 = dma.done %s949, 512
        $region56: #{tpu_custom_call.1} parent=51 // pred_fallthru
          _
      $region52: #{tpu_custom_call.1} parent=5 // pred_fallthru
        _
    $region6: #{tpu_custom_call.1} parent=1 // loop_footer
      %s21 = sadd.s32 1, %s17
    $region7: #{tpu_custom_call.1} parent=1 // loop_footer_branch
      %16 = sbr.rel target = $region3
    $region8: #{tpu_custom_call.1} parent=1 // loop_exit
      _
    %954 = vsyncpa [#allocation3], 1
    %s955 = scalar_lea.sflag [#allocation3], 1
    %956 = vsyncpa %s955, 1
    %957 = vsyncpa [#allocation4], 1
    %s958 = scalar_lea.sflag [#allocation4], 1
    %959 = vsyncpa %s958, 1

</llo_original>
